<compile_context>
chip_gen: v5e
topology: v5e:2x2
jax: 0.10.0
libtpu: 0.0.40
codegen_flags: <defaults>
</compile_context>

<pallas_src>
import functools

import jax
import jax.numpy as jnp
from jax import lax
from jax.experimental import pallas as pl
from jax.experimental.pallas import tpu as pltpu

NHIDDEN = 128          # fixed by the module (nhidden = 128)
EPS = 1e-5             # PositionalNorm2d eps


def _shift_lanes(x, s, size):
    """y[:, j] = x[:, (j + s) mod size]  (static circular shift along the lane axis)."""
    i = s % size
    if i == 0:
        return x
    return jnp.concatenate([x[:, i:], x[:, :i]], axis=1)


def _spade_kernel(x_ref, segcols_ref, mask_ref, w1_ref, b1_ref, w2_ref, b2_ref,
                  out_ref, *, K, W, HW, Cx):
    """Per-batch-element SPADE forward, spatial-in-lanes layout.

    x_ref:       (Cx, HW)        f32   features to be PONO-normalized
    segcols_ref: (K*K*Cs, HW)    bf16  im2col of the resized segmap (tap-major)
    mask_ref:    (K*K, HW)       bf16  1.0 where the tap's shifted pixel is in-bounds
    w1_ref:      (nh, K*K*Cs)    bf16  conv1 weights, tap-major flattened
    b1_ref:      (nh, 1)         f32
    w2_ref:      (2*Cx, K*K*nh)  bf16  conv2 weights, tap-major flattened
    b2_ref:      (2*Cx, 1)       f32
    out_ref:     (Cx, HW)
    """
    pw = K // 2

    # ---- conv1 (label_nc -> nhidden): single GEMM (MXU, f32 acc), + bias, ReLU
    hid = jnp.dot(w1_ref[...], segcols_ref[...],
                  preferred_element_type=jnp.float32)            # (nh, HW)
    hid = jnp.maximum(hid + b1_ref[...], 0.0)
    hid_bf = hid.astype(jnp.bfloat16)

    # ---- conv2 (nhidden -> 2*norm_nc): build the im2col operand in-registers by
    # circularly shifting the flat hidden map along the lane (HW) axis and zeroing
    # the out-of-image (wrapped / row-crossing) positions with precomputed masks,
    # then do one deep-K GEMM (contraction = K*K*nh).
    cols = []
    for kh in range(K):
        for kw in range(K):
            dh, dw = kh - pw, kw - pw
            if dh == 0 and dw == 0:
                cols.append(hid_bf)                               # center tap: no mask
            else:
                s = dh * W + dw                                   # flat lane offset
                shifted = _shift_lanes(hid_bf, s, HW)             # (nh, HW)
                t = kh * K + kw
                cols.append(shifted * mask_ref[t:t + 1, :])
    cols_mat = jnp.concatenate(cols, axis=0)                      # (K*K*nh, HW)

    gb = jnp.dot(w2_ref[...], cols_mat,
                 preferred_element_type=jnp.float32) + b2_ref[...]  # (2Cx, HW)
    gamma = gb[:Cx, :]
    beta = gb[Cx:, :]

    # ---- PONO (PositionalNorm2d, affine=False): normalize over channels (sublanes)
    xv = x_ref[...].astype(jnp.float32)                           # (Cx, HW)
    mean = jnp.mean(xv, axis=0, keepdims=True)
    centered = xv - mean
    # torch Tensor.var defaults to unbiased (correction = 1)
    var = jnp.sum(centered * centered, axis=0, keepdims=True) / (Cx - 1)
    normalized = centered * lax.rsqrt(var + EPS)                  # rsqrt -> EUP slot

    out_ref[...] = (normalized * (1.0 + gamma) + beta).astype(out_ref.dtype)


def spade_pallas(x_nchw, seg_nchw, w1, b1, w2, b2, kernel_size):
    """SPADE forward. x_nchw: (N, norm_nc, H, W); seg_nchw: (N, label_nc, Hs, Ws).

    w1: (nhidden, label_nc, K, K), b1: (nhidden,)
    w2: (2*norm_nc, nhidden, K, K), b2: (2*norm_nc,)
    Returns (N, norm_nc, H, W), same as the PyTorch module.
    """
    N, Cx, H, W = x_nchw.shape
    _, Cs, Hs, Ws = seg_nchw.shape
    K = kernel_size
    pw = K // 2
    nh = w1.shape[0]
    HW = H * W

    # --- glue: nearest-neighbor resize of segmap to x's spatial size (PyTorch 'nearest')
    idx_h = (jnp.arange(H) * Hs) // H
    idx_w = (jnp.arange(W) * Ws) // W
    seg_r = seg_nchw[:, :, idx_h, :][:, :, :, idx_w]              # (N, Cs, H, W)

    # --- glue: im2col of the segmap for conv1 (tap-major: kh, kw, cin), bf16 operand
    seg_p = jnp.pad(seg_r, ((0, 0), (0, 0), (pw, pw), (pw, pw)))
    patches = [seg_p[:, :, kh:kh + H, kw:kw + W]
               for kh in range(K) for kw in range(K)]             # each (N, Cs, H, W)
    seg_cols = jnp.concatenate(patches, axis=1).reshape(N, K * K * Cs, HW)
    seg_cols = seg_cols.astype(jnp.bfloat16)

    # --- glue: boundary-validity masks for the in-kernel conv2 im2col (K*K, HW)
    ar_h = jnp.arange(H)
    ar_w = jnp.arange(W)
    mrows = []
    for kh in range(K):
        for kw in range(K):
            dh, dw = kh - pw, kw - pw
            vh = (ar_h + dh >= 0) & (ar_h + dh < H)
            vw = (ar_w + dw >= 0) & (ar_w + dw < W)
            mrows.append((vh[:, None] & vw[None, :]).reshape(HW))
    masks = jnp.stack(mrows, axis=0).astype(jnp.bfloat16)         # (K*K, HW)

    # --- glue: tap-major flattened weights (bf16) and column-vector biases (f32)
    w1_f = jnp.transpose(w1, (0, 2, 3, 1)).reshape(nh, K * K * Cs).astype(jnp.bfloat16)
    w2_f = jnp.transpose(w2, (0, 2, 3, 1)).reshape(2 * Cx, K * K * nh).astype(jnp.bfloat16)
    b1_c = b1.reshape(nh, 1).astype(jnp.float32)
    b2_c = b2.reshape(2 * Cx, 1).astype(jnp.float32)

    # NCHW -> (N, C, H*W) is a pure reshape (no transpose needed in this layout).
    x_flat = x_nchw.reshape(N, Cx, HW)

    kernel = functools.partial(_spade_kernel, K=K, W=W, HW=HW, Cx=Cx)

    out_flat = pl.pallas_call(
        kernel,
        out_shape=jax.ShapeDtypeStruct((N, Cx, HW), x_nchw.dtype),
        grid_spec=pltpu.PrefetchScalarGridSpec(
            num_scalar_prefetch=0,
            grid=(N,),
            in_specs=[
                pl.BlockSpec((None, Cx, HW), lambda n: (n, 0, 0)),
                pl.BlockSpec((None, K * K * Cs, HW), lambda n: (n, 0, 0)),
                pl.BlockSpec((K * K, HW), lambda n: (0, 0)),
                pl.BlockSpec((nh, K * K * Cs), lambda n: (0, 0)),
                pl.BlockSpec((nh, 1), lambda n: (0, 0)),
                pl.BlockSpec((2 * Cx, K * K * nh), lambda n: (0, 0)),
                pl.BlockSpec((2 * Cx, 1), lambda n: (0, 0)),
            ],
            out_specs=pl.BlockSpec((None, Cx, HW), lambda n: (n, 0, 0)),
        ),
        compiler_params=pltpu.CompilerParams(
            dimension_semantics=("parallel",)),   # batch elements are independent
    )(x_flat, seg_cols, masks, w1_f, b1_c, w2_f, b2_c)

    return out_flat.reshape(N, Cx, H, W)


def spade_reference(x, seg, w1, b1, w2, b2, K, conv_dtype=jnp.float32):
    """Pure-JAX reference matching the PyTorch SPADE(PONO=True) forward.

    conv_dtype controls the precision of the conv *operands* (accumulation is f32),
    so conv_dtype=bfloat16 mirrors the kernel's bf16-operand MXU path exactly.
    """
    pw = K // 2
    N, Cx, H, W = x.shape
    Hs, Ws = seg.shape[2], seg.shape[3]
    idx_h = (jnp.arange(H) * Hs) // H
    idx_w = (jnp.arange(W) * Ws) // W
    seg_r = seg[:, :, idx_h, :][:, :, :, idx_w]

    mean = jnp.mean(x, axis=1, keepdims=True)
    var = jnp.var(x, axis=1, keepdims=True, ddof=1)
    normalized = (x - mean) / jnp.sqrt(var + EPS)

    dn = ('NCHW', 'OIHW', 'NCHW')
    h = lax.conv_general_dilated(seg_r.astype(conv_dtype), w1.astype(conv_dtype),
                                 (1, 1), [(pw, pw), (pw, pw)],
                                 dimension_numbers=dn,
                                 preferred_element_type=jnp.float32)
    h = jnp.maximum(h + b1[None, :, None, None], 0.0)
    gb = lax.conv_general_dilated(h.astype(conv_dtype), w2.astype(conv_dtype),
                                  (1, 1), [(pw, pw), (pw, pw)],
                                  dimension_numbers=dn,
                                  preferred_element_type=jnp.float32)
    gb = gb + b2[None, :, None, None]
    gamma, beta = jnp.split(gb, 2, axis=1)
    return normalized * (1 + gamma) + beta


if __name__ == "__main__":
    # Small shapes consistent with SPADE(kernel_size=3, norm_nc=4, label_nc=3, PONO=True)
    N, norm_nc, label_nc = 2, 4, 3
    H = W = 16
    Hs = Ws = 8          # segmap comes in at half resolution -> nearest upsample
    K = 3

    key = jax.random.PRNGKey(0)
    k1, k2, k3, k4, k5, k6 = jax.random.split(key, 6)
    x = jax.random.normal(k1, (N, norm_nc, H, W), jnp.float32)
    segmap = jax.random.normal(k2, (N, label_nc, Hs, Ws), jnp.float32)

    # deterministic synthetic parameters (shapes from the module's __init__)
    w1 = 0.10 * jax.random.normal(k3, (NHIDDEN, label_nc, K, K), jnp.float32)
    b1 = 0.10 * jax.random.normal(k4, (NHIDDEN,), jnp.float32)
    w2 = 0.05 * jax.random.normal(k5, (2 * norm_nc, NHIDDEN, K, K), jnp.float32)
    b2 = 0.10 * jax.random.normal(k6, (2 * norm_nc,), jnp.float32)

    out = spade_pallas(x, segmap, w1, b1, w2, b2, K)
    out = jax.block_until_ready(out)
    assert out.shape == (N, norm_nc, H, W)

    # (1) Tight check against a reference that mirrors the kernel's bf16 conv
    #     operands (f32 accumulation) -> verifies the kernel math itself.
    ref_bf16 = spade_reference(x, segmap, w1, b1, w2, b2, K, conv_dtype=jnp.bfloat16)
    err_matched = float(jnp.max(jnp.abs(out - ref_bf16)))
    assert err_matched < 2e-3, f"matched-precision max abs err {err_matched}"

    # (2) Sanity check against the exact f32 reference; tolerance reflects the
    #     bf16 conv-operand rounding used for the MXU path.
    ref_f32 = spade_reference(x, segmap, w1, b1, w2, b2, K, conv_dtype=jnp.float32)
    err_exact = float(jnp.max(jnp.abs(out - ref_f32)))
    assert err_exact < 5e-2, f"f32-reference max abs err {err_exact}"

    print("KERNEL_OK")
</pallas_src>

<mosaic_0001>
module attributes {stable_mosaic.version = 11 : i64} {
  func.func @_spade_kernel(%arg0: i32, %arg1: memref<1x4x256xf32, #tpu.memory_space<vmem>>, %arg2: memref<1x27x256xbf16, #tpu.memory_space<vmem>>, %arg3: memref<9x256xbf16, #tpu.memory_space<vmem>>, %arg4: memref<128x27xbf16, #tpu.memory_space<vmem>>, %arg5: memref<128x1xf32, #tpu.memory_space<vmem>>, %arg6: memref<8x1152xbf16, #tpu.memory_space<vmem>>, %arg7: memref<8x1xf32, #tpu.memory_space<vmem>>, %arg8: memref<1x4x256xf32, #tpu.memory_space<vmem>>) attributes {dimension_semantics = [#tpu.dimension_semantics<parallel>], iteration_bounds = array<i64: 2>, scalar_prefetch = 0 : i64, scratch_operands = 0 : i64, tpu.core_type = #tpu.core_type<tc>, window_params = [{transform_indices = @transform_0, window_bounds = array<i64: 1, 4, 256>}, {transform_indices = @transform_1, window_bounds = array<i64: 1, 27, 256>}, {pipeline_mode = #tpu.pipeline_mode<synchronous>, transform_indices = @transform_2, window_bounds = array<i64: 9, 256>}, {pipeline_mode = #tpu.pipeline_mode<synchronous>, transform_indices = @transform_3, window_bounds = array<i64: 128, 27>}, {pipeline_mode = #tpu.pipeline_mode<synchronous>, transform_indices = @transform_4, window_bounds = array<i64: 128, 1>}, {pipeline_mode = #tpu.pipeline_mode<synchronous>, transform_indices = @transform_5, window_bounds = array<i64: 8, 1152>}, {pipeline_mode = #tpu.pipeline_mode<synchronous>, transform_indices = @transform_6, window_bounds = array<i64: 8, 1>}, {transform_indices = @transform_7, window_bounds = array<i64: 1, 4, 256>}]} {
    %c0 = arith.constant 0 : index
    %c0_0 = arith.constant 0 : index
    %0 = vector.load %arg4[%c0, %c0_0] : memref<128x27xbf16, #tpu.memory_space<vmem>>, vector<128x27xbf16>
    %c0_1 = arith.constant 0 : index
    %c0_2 = arith.constant 0 : index
    %c0_3 = arith.constant 0 : index
    %1 = vector.load %arg2[%c0_1, %c0_2, %c0_3] : memref<1x27x256xbf16, #tpu.memory_space<vmem>>, vector<1x27x256xbf16>
    %2 = vector.shape_cast %1 : vector<1x27x256xbf16> to vector<27x256xbf16>
    %cst = arith.constant dense<0.000000e+00> : vector<128x256xf32>
    %3 = tpu.matmul %0, %2, %cst {dimension_numbers = #tpu.dot_dimension_numbers<[1], [0], [0], [1], [0, 0, 1, 1], [], []>} : vector<128x27xbf16>, vector<27x256xbf16>, vector<128x256xf32> -> vector<128x256xf32>
    %c0_4 = arith.constant 0 : index
    %c0_5 = arith.constant 0 : index
    %4 = vector.load %arg5[%c0_4, %c0_5] : memref<128x1xf32, #tpu.memory_space<vmem>>, vector<128x1xf32>
    %5 = vector.broadcast %4 : vector<128x1xf32> to vector<128x256xf32>
    %6 = arith.addf %3, %5 : vector<128x256xf32>
    %cst_6 = arith.constant 0.000000e+00 : f32
    %7 = vector.broadcast %cst_6 : f32 to vector<128x256xf32>
    %8 = arith.maximumf %6, %7 : vector<128x256xf32>
    %9 = arith.truncf %8 : vector<128x256xf32> to vector<128x256xbf16>
    %10 = vector.extract_strided_slice %9 {offsets = [0, 239], sizes = [128, 17], strides = [1, 1]} : vector<128x256xbf16> to vector<128x17xbf16>
    %11 = vector.extract_strided_slice %9 {offsets = [0, 0], sizes = [128, 239], strides = [1, 1]} : vector<128x256xbf16> to vector<128x239xbf16>
    %12 = tpu.concatenate %10, %11 in 1 : vector<128x17xbf16>, vector<128x239xbf16> -> vector<128x256xbf16>
    %c0_7 = arith.constant 0 : index
    %c0_8 = arith.constant 0 : index
    %13 = vector.load %arg3[%c0_7, %c0_8] : memref<9x256xbf16, #tpu.memory_space<vmem>>, vector<1x256xbf16>
    %14 = vector.broadcast %13 : vector<1x256xbf16> to vector<128x256xbf16>
    %15 = arith.mulf %12, %14 : vector<128x256xbf16>
    %16 = vector.extract_strided_slice %9 {offsets = [0, 240], sizes = [128, 16], strides = [1, 1]} : vector<128x256xbf16> to vector<128x16xbf16>
    %17 = vector.extract_strided_slice %9 {offsets = [0, 0], sizes = [128, 240], strides = [1, 1]} : vector<128x256xbf16> to vector<128x240xbf16>
    %18 = tpu.concatenate %16, %17 in 1 : vector<128x16xbf16>, vector<128x240xbf16> -> vector<128x256xbf16>
    %c1 = arith.constant 1 : index
    %c0_9 = arith.constant 0 : index
    %19 = vector.load %arg3[%c1, %c0_9] : memref<9x256xbf16, #tpu.memory_space<vmem>>, vector<1x256xbf16>
    %20 = vector.broadcast %19 : vector<1x256xbf16> to vector<128x256xbf16>
    %21 = arith.mulf %18, %20 : vector<128x256xbf16>
    %22 = vector.extract_strided_slice %9 {offsets = [0, 241], sizes = [128, 15], strides = [1, 1]} : vector<128x256xbf16> to vector<128x15xbf16>
    %23 = vector.extract_strided_slice %9 {offsets = [0, 0], sizes = [128, 241], strides = [1, 1]} : vector<128x256xbf16> to vector<128x241xbf16>
    %24 = tpu.concatenate %22, %23 in 1 : vector<128x15xbf16>, vector<128x241xbf16> -> vector<128x256xbf16>
    %c2 = arith.constant 2 : index
    %c0_10 = arith.constant 0 : index
    %25 = vector.load %arg3[%c2, %c0_10] : memref<9x256xbf16, #tpu.memory_space<vmem>>, vector<1x256xbf16>
    %26 = vector.broadcast %25 : vector<1x256xbf16> to vector<128x256xbf16>
    %27 = arith.mulf %24, %26 : vector<128x256xbf16>
    %28 = vector.extract_strided_slice %9 {offsets = [0, 255], sizes = [128, 1], strides = [1, 1]} : vector<128x256xbf16> to vector<128x1xbf16>
    %29 = vector.extract_strided_slice %9 {offsets = [0, 0], sizes = [128, 255], strides = [1, 1]} : vector<128x256xbf16> to vector<128x255xbf16>
    %30 = tpu.concatenate %28, %29 in 1 : vector<128x1xbf16>, vector<128x255xbf16> -> vector<128x256xbf16>
    %c3 = arith.constant 3 : index
    %c0_11 = arith.constant 0 : index
    %31 = vector.load %arg3[%c3, %c0_11] : memref<9x256xbf16, #tpu.memory_space<vmem>>, vector<1x256xbf16>
    %32 = vector.broadcast %31 : vector<1x256xbf16> to vector<128x256xbf16>
    %33 = arith.mulf %30, %32 : vector<128x256xbf16>
    %34 = vector.extract_strided_slice %9 {offsets = [0, 1], sizes = [128, 255], strides = [1, 1]} : vector<128x256xbf16> to vector<128x255xbf16>
    %35 = vector.extract_strided_slice %9 {offsets = [0, 0], sizes = [128, 1], strides = [1, 1]} : vector<128x256xbf16> to vector<128x1xbf16>
    %36 = tpu.concatenate %34, %35 in 1 : vector<128x255xbf16>, vector<128x1xbf16> -> vector<128x256xbf16>
    %c5 = arith.constant 5 : index
    %c0_12 = arith.constant 0 : index
    %37 = vector.load %arg3[%c5, %c0_12] : memref<9x256xbf16, #tpu.memory_space<vmem>>, vector<1x256xbf16>
    %38 = vector.broadcast %37 : vector<1x256xbf16> to vector<128x256xbf16>
    %39 = arith.mulf %36, %38 : vector<128x256xbf16>
    %40 = vector.extract_strided_slice %9 {offsets = [0, 15], sizes = [128, 241], strides = [1, 1]} : vector<128x256xbf16> to vector<128x241xbf16>
    %41 = vector.extract_strided_slice %9 {offsets = [0, 0], sizes = [128, 15], strides = [1, 1]} : vector<128x256xbf16> to vector<128x15xbf16>
    %42 = tpu.concatenate %40, %41 in 1 : vector<128x241xbf16>, vector<128x15xbf16> -> vector<128x256xbf16>
    %c6 = arith.constant 6 : index
    %c0_13 = arith.constant 0 : index
    %43 = vector.load %arg3[%c6, %c0_13] : memref<9x256xbf16, #tpu.memory_space<vmem>>, vector<1x256xbf16>
    %44 = vector.broadcast %43 : vector<1x256xbf16> to vector<128x256xbf16>
    %45 = arith.mulf %42, %44 : vector<128x256xbf16>
    %46 = vector.extract_strided_slice %9 {offsets = [0, 16], sizes = [128, 240], strides = [1, 1]} : vector<128x256xbf16> to vector<128x240xbf16>
    %47 = vector.extract_strided_slice %9 {offsets = [0, 0], sizes = [128, 16], strides = [1, 1]} : vector<128x256xbf16> to vector<128x16xbf16>
    %48 = tpu.concatenate %46, %47 in 1 : vector<128x240xbf16>, vector<128x16xbf16> -> vector<128x256xbf16>
    %c7 = arith.constant 7 : index
    %c0_14 = arith.constant 0 : index
    %49 = vector.load %arg3[%c7, %c0_14] : memref<9x256xbf16, #tpu.memory_space<vmem>>, vector<1x256xbf16>
    %50 = vector.broadcast %49 : vector<1x256xbf16> to vector<128x256xbf16>
    %51 = arith.mulf %48, %50 : vector<128x256xbf16>
    %52 = vector.extract_strided_slice %9 {offsets = [0, 17], sizes = [128, 239], strides = [1, 1]} : vector<128x256xbf16> to vector<128x239xbf16>
    %53 = vector.extract_strided_slice %9 {offsets = [0, 0], sizes = [128, 17], strides = [1, 1]} : vector<128x256xbf16> to vector<128x17xbf16>
    %54 = tpu.concatenate %52, %53 in 1 : vector<128x239xbf16>, vector<128x17xbf16> -> vector<128x256xbf16>
    %c8 = arith.constant 8 : index
    %c0_15 = arith.constant 0 : index
    %55 = vector.load %arg3[%c8, %c0_15] : memref<9x256xbf16, #tpu.memory_space<vmem>>, vector<1x256xbf16>
    %56 = vector.broadcast %55 : vector<1x256xbf16> to vector<128x256xbf16>
    %57 = arith.mulf %54, %56 : vector<128x256xbf16>
    %58 = tpu.concatenate %15, %21, %27, %33, %9, %39, %45, %51, %57 in 0 : vector<128x256xbf16>, vector<128x256xbf16>, vector<128x256xbf16>, vector<128x256xbf16>, vector<128x256xbf16>, vector<128x256xbf16>, vector<128x256xbf16>, vector<128x256xbf16>, vector<128x256xbf16> -> vector<1152x256xbf16>
    %c0_16 = arith.constant 0 : index
    %c0_17 = arith.constant 0 : index
    %59 = vector.load %arg6[%c0_16, %c0_17] : memref<8x1152xbf16, #tpu.memory_space<vmem>>, vector<8x1152xbf16>
    %cst_18 = arith.constant dense<0.000000e+00> : vector<8x256xf32>
    %60 = tpu.matmul %59, %58, %cst_18 {dimension_numbers = #tpu.dot_dimension_numbers<[1], [0], [0], [1], [0, 0, 1, 1], [], []>} : vector<8x1152xbf16>, vector<1152x256xbf16>, vector<8x256xf32> -> vector<8x256xf32>
    %c0_19 = arith.constant 0 : index
    %c0_20 = arith.constant 0 : index
    %61 = vector.load %arg7[%c0_19, %c0_20] : memref<8x1xf32, #tpu.memory_space<vmem>>, vector<8x1xf32>
    %62 = vector.broadcast %61 : vector<8x1xf32> to vector<8x256xf32>
    %63 = arith.addf %60, %62 : vector<8x256xf32>
    %64 = vector.extract_strided_slice %63 {offsets = [0, 0], sizes = [4, 256], strides = [1, 1]} : vector<8x256xf32> to vector<4x256xf32>
    %65 = vector.extract_strided_slice %63 {offsets = [4, 0], sizes = [4, 256], strides = [1, 1]} : vector<8x256xf32> to vector<4x256xf32>
    %c0_21 = arith.constant 0 : index
    %c0_22 = arith.constant 0 : index
    %c0_23 = arith.constant 0 : index
    %66 = vector.load %arg1[%c0_21, %c0_22, %c0_23] : memref<1x4x256xf32, #tpu.memory_space<vmem>>, vector<1x4x256xf32>
    %67 = vector.shape_cast %66 : vector<1x4x256xf32> to vector<4x256xf32>
    %cst_24 = arith.constant dense<0.000000e+00> : vector<256xf32>
    %68 = vector.multi_reduction <add>, %67, %cst_24 [0] : vector<4x256xf32> to vector<256xf32>
    %69 = vector.shape_cast %68 : vector<256xf32> to vector<1x256xf32>
    %cst_25 = arith.constant 4.000000e+00 : f32
    %70 = vector.broadcast %cst_25 : f32 to vector<1x256xf32>
    %71 = arith.divf %69, %70 : vector<1x256xf32>
    %72 = vector.broadcast %71 : vector<1x256xf32> to vector<4x256xf32>
    %73 = arith.subf %67, %72 : vector<4x256xf32>
    %74 = arith.mulf %73, %73 : vector<4x256xf32>
    %cst_26 = arith.constant dense<0.000000e+00> : vector<256xf32>
    %75 = vector.multi_reduction <add>, %74, %cst_26 [0] : vector<4x256xf32> to vector<256xf32>
    %76 = vector.shape_cast %75 : vector<256xf32> to vector<1x256xf32>
    %cst_27 = arith.constant 3.000000e+00 : f32
    %77 = vector.broadcast %cst_27 : f32 to vector<1x256xf32>
    %78 = arith.divf %76, %77 : vector<1x256xf32>
    %cst_28 = arith.constant 9.99999974E-6 : f32
    %79 = vector.broadcast %cst_28 : f32 to vector<1x256xf32>
    %80 = arith.addf %78, %79 : vector<1x256xf32>
    %81 = math.rsqrt %80 : vector<1x256xf32>
    %82 = vector.broadcast %81 : vector<1x256xf32> to vector<4x256xf32>
    %83 = arith.mulf %73, %82 : vector<4x256xf32>
    %cst_29 = arith.constant 1.000000e+00 : f32
    %84 = vector.broadcast %cst_29 : f32 to vector<4x256xf32>
    %85 = arith.addf %84, %64 : vector<4x256xf32>
    %86 = arith.mulf %83, %85 : vector<4x256xf32>
    %87 = arith.addf %86, %65 : vector<4x256xf32>
    %c0_30 = arith.constant 0 : index
    %c0_31 = arith.constant 0 : index
    %c0_32 = arith.constant 0 : index
    %88 = vector.load %arg8[%c0_30, %c0_31, %c0_32] : memref<1x4x256xf32, #tpu.memory_space<vmem>>, vector<1x4x256xf32>
    %89 = vector.shape_cast %88 : vector<1x4x256xf32> to vector<4x256xf32>
    %90 = vector.shape_cast %87 : vector<4x256xf32> to vector<1x4x256xf32>
    tpu.vector_store %arg8[%c0_30, %c0_31, %c0_32], %90 {strides = array<i32>} : memref<1x4x256xf32, #tpu.memory_space<vmem>>, vector<1x4x256xf32>,
    return
  }
  func.func @transform_0(%arg0: i32) -> (i32, i32, i32) {
    %c0_i32 = arith.constant 0 : i32
    %c0_i32_0 = arith.constant 0 : i32
    %c0_i32_1 = arith.constant 0 : i32
    return %arg0, %c0_i32, %c0_i32_0 : i32, i32, i32
  }
  func.func @transform_1(%arg0: i32) -> (i32, i32, i32) {
    %c0_i32 = arith.constant 0 : i32
    %c0_i32_0 = arith.constant 0 : i32
    %c0_i32_1 = arith.constant 0 : i32
    return %arg0, %c0_i32, %c0_i32_0 : i32, i32, i32
  }
  func.func @transform_2(%arg0: i32) -> (i32, i32) {
    %c0_i32 = arith.constant 0 : i32
    %c0_i32_0 = arith.constant 0 : i32
    %c0_i32_1 = arith.constant 0 : i32
    return %c0_i32, %c0_i32_0 : i32, i32
  }
  func.func @transform_3(%arg0: i32) -> (i32, i32) {
    %c0_i32 = arith.constant 0 : i32
    %c0_i32_0 = arith.constant 0 : i32
    %c0_i32_1 = arith.constant 0 : i32
    return %c0_i32, %c0_i32_0 : i32, i32
  }
  func.func @transform_4(%arg0: i32) -> (i32, i32) {
    %c0_i32 = arith.constant 0 : i32
    %c0_i32_0 = arith.constant 0 : i32
    %c0_i32_1 = arith.constant 0 : i32
    return %c0_i32, %c0_i32_0 : i32, i32
  }
  func.func @transform_5(%arg0: i32) -> (i32, i32) {
    %c0_i32 = arith.constant 0 : i32
    %c0_i32_0 = arith.constant 0 : i32
    %c0_i32_1 = arith.constant 0 : i32
    return %c0_i32, %c0_i32_0 : i32, i32
  }
  func.func @transform_6(%arg0: i32) -> (i32, i32) {
    %c0_i32 = arith.constant 0 : i32
    %c0_i32_0 = arith.constant 0 : i32
    %c0_i32_1 = arith.constant 0 : i32
    return %c0_i32, %c0_i32_0 : i32, i32
  }
  func.func @transform_7(%arg0: i32) -> (i32, i32, i32) {
    %c0_i32 = arith.constant 0 : i32
    %c0_i32_0 = arith.constant 0 : i32
    %c0_i32_1 = arith.constant 0 : i32
    return %arg0, %c0_i32, %c0_i32_0 : i32, i32, i32
  }
}

</mosaic_0001>

<llo_original>
// kernel: tpu_custom_call.1
$region0: #{tpu_custom_call.1}
  #allocation0 [shape = 'u32[]', space=smem, size = 0x4, offset = 0x4, fixed_abs, tag = 'smem constant byte address 0x4 - core index']
  #allocation1 [shape = 'u32[72,128]{1,0:T(1,128)}', space=vmem, size = 0x9000, scoped, tag = 'internal scratch']
  %s0 = inlined_call_operand.vmem [shape: f32[2,4,256], index: 0, kind: input, shape index: {}]
  %s1 = inlined_call_operand.vmem [shape: bf16[2,27,256], index: 1, kind: input, shape index: {}]
  %s2 = inlined_call_operand.vmem [shape: bf16[9,256], index: 2, kind: input, shape index: {}]
  %s3 = inlined_call_operand.vmem [shape: bf16[128,27], index: 3, kind: input, shape index: {}]
  %s4 = inlined_call_operand.vmem [shape: f32[128,1], index: 4, kind: input, shape index: {}]
  %s5 = inlined_call_operand.vmem [shape: bf16[8,1152], index: 5, kind: input, shape index: {}]
  %s6 = inlined_call_operand.vmem [shape: f32[8,1], index: 6, kind: input, shape index: {}]
  %s7 = inlined_call_operand.hbm [shape: f32[2,4,256], index: 7, kind: output, shape index: {}]
  %s8 = sld [smem:[#allocation0]]
  $region61: #{tpu_custom_call.1} parent=0
    _
  %s10 = ssub.s32 1, %s8
  %s11 = scalar_select 0, %s10, %s8
  $region1: #{tpu_custom_call.1} parent=0
    #allocation2 [shape = 'u8[8192]{0}', space=vmem, size = 0x2000, scoped, tag = 'output window, operand 0']
    #allocation3 [shape = 's32[2]{0}', space=sflag, size = 0x8, scoped, tag = 'scoped memory for tpu_custom_call.1']
    %12 = vsyncpa [#allocation3], 0
    %s13 = scalar_lea.sflag [#allocation3], 1
    %14 = vsyncpa %s13, 0
    loop: start=0, step=1, limit=4
    $region2: #{tpu_custom_call.1} parent=1 // loop_pre_header
      _
    $region3: #{tpu_custom_call.1} parent=1 // loop_header
      %s16 = sphi 0, %s20
      %p17 = scmp.ge.s32.totalorder %s16, 4
      %s26 = sphi 0, %s28
      %s29 = sphi 0, %s26
      %s30 = sphi 0, %s29
      %s46 = sphi 0, %s30
      %s52 = sphi 0, %s54
      %s55 = sphi 0, %s52
      %s56 = sphi 0, %s55
      %s72 = sphi 0, %s56
      %s76 = sphi 0, %s76
      %s78 = sphi 0, %s76
      %s79 = sphi 0, %s78
      %s93 = sphi 0, %s79
      %s97 = sphi 0, %s97
      %s99 = sphi 0, %s97
      %s100 = sphi 0, %s99
      %s114 = sphi 0, %s100
      %s118 = sphi 0, %s118
      %s120 = sphi 0, %s118
      %s121 = sphi 0, %s120
      %s135 = sphi 0, %s121
      %s139 = sphi 0, %s139
      %s141 = sphi 0, %s139
      %s142 = sphi 0, %s141
      %s156 = sphi 0, %s142
      %s160 = sphi 0, %s160
      %s162 = sphi 0, %s160
      %s163 = sphi 0, %s162
      %s177 = sphi 0, %s163
      %s183 = sphi 0, %s185
      %s186 = sphi 0, %s183
      %s187 = sphi 0, %s186
      %s203 = sphi 0, %s187
    $region4: #{tpu_custom_call.1} parent=1 // loop_header_branch
      %19 = sbr.rel (%p17) target = $region8
    $region5: #{tpu_custom_call.1} parent=1 // loop_body
      %s21 = ssub.s32 %s16, 1
      %s22 = ssub.s32 %s16, 2
      %s23 = sadd.s32 %s16, 1
      %s24 = ssub.s32 %s16, %s23
      %p25 = scmp.eq.s32.totalorder %s24, 0
      %s27 = sadd.s32 %s26, 1
      %s28 = scalar_select %p25, %s26, %s27
      %p31 = pneg %p25
      %p32 = scmp.eq.s32.totalorder %s16, 1
      %p33 = por %p31, %p32
      %p34 = scmp.ne.s32.totalorder %s26, %s29
      %p35 = scmp.eq.s32.totalorder %s16, 0
      %p36 = por %p34, %p35
      %p37 = scmp.ne.s32.totalorder %s26, %s29
      %p38 = scmp.eq.s32.totalorder %s21, 1
      %p39 = por %p37, %p38
      %p40 = scmp.ne.s32.totalorder %s29, %s30
      %p41 = scmp.eq.s32.totalorder %s21, 0
      %p42 = por %p40, %p41
      %p43 = scmp.ne.s32.totalorder %s29, %s30
      %p44 = scmp.eq.s32.totalorder %s22, 1
      %p45 = por %p43, %p44
      %p47 = scmp.ne.s32.totalorder %s30, %s46
      %p48 = scmp.eq.s32.totalorder %s22, 0
      %p49 = por %p47, %p48
      %s50 = ssub.s32 %s16, %s23
      %p51 = scmp.eq.s32.totalorder %s50, 0
      %s53 = sadd.s32 %s52, 1
      %s54 = scalar_select %p51, %s52, %s53
      %p57 = pneg %p51
      %p58 = scmp.eq.s32.totalorder %s16, 1
      %p59 = por %p57, %p58
      %p60 = scmp.ne.s32.totalorder %s52, %s55
      %p61 = scmp.eq.s32.totalorder %s16, 0
      %p62 = por %p60, %p61
      %p63 = scmp.ne.s32.totalorder %s52, %s55
      %p64 = scmp.eq.s32.totalorder %s21, 1
      %p65 = por %p63, %p64
      %p66 = scmp.ne.s32.totalorder %s55, %s56
      %p67 = scmp.eq.s32.totalorder %s21, 0
      %p68 = por %p66, %p67
      %p69 = scmp.ne.s32.totalorder %s55, %s56
      %p70 = scmp.eq.s32.totalorder %s22, 1
      %p71 = por %p69, %p70
      %p73 = scmp.ne.s32.totalorder %s56, %s72
      %p74 = scmp.eq.s32.totalorder %s22, 0
      %p75 = por %p73, %p74
      %s77 = sadd.s32 %s76, 1
      %p80 = scmp.eq.s32.totalorder %s16, 1
      %p81 = scmp.ne.s32.totalorder %s76, %s78
      %p82 = scmp.eq.s32.totalorder %s16, 0
      %p83 = por %p81, %p82
      %p84 = scmp.ne.s32.totalorder %s76, %s78
      %p85 = scmp.eq.s32.totalorder %s21, 1
      %p86 = por %p84, %p85
      %p87 = scmp.ne.s32.totalorder %s78, %s79
      %p88 = scmp.eq.s32.totalorder %s21, 0
      %p89 = por %p87, %p88
      %p90 = scmp.ne.s32.totalorder %s78, %s79
      %p91 = scmp.eq.s32.totalorder %s22, 1
      %p92 = por %p90, %p91
      %p94 = scmp.ne.s32.totalorder %s79, %s93
      %p95 = scmp.eq.s32.totalorder %s22, 0
      %p96 = por %p94, %p95
      %s98 = sadd.s32 %s97, 1
      %p101 = scmp.eq.s32.totalorder %s16, 1
      %p102 = scmp.ne.s32.totalorder %s97, %s99
      %p103 = scmp.eq.s32.totalorder %s16, 0
      %p104 = por %p102, %p103
      %p105 = scmp.ne.s32.totalorder %s97, %s99
      %p106 = scmp.eq.s32.totalorder %s21, 1
      %p107 = por %p105, %p106
      %p108 = scmp.ne.s32.totalorder %s99, %s100
      %p109 = scmp.eq.s32.totalorder %s21, 0
      %p110 = por %p108, %p109
      %p111 = scmp.ne.s32.totalorder %s99, %s100
      %p112 = scmp.eq.s32.totalorder %s22, 1
      %p113 = por %p111, %p112
      %p115 = scmp.ne.s32.totalorder %s100, %s114
      %p116 = scmp.eq.s32.totalorder %s22, 0
      %p117 = por %p115, %p116
      %s119 = sadd.s32 %s118, 1
      %p122 = scmp.eq.s32.totalorder %s16, 1
      %p123 = scmp.ne.s32.totalorder %s118, %s120
      %p124 = scmp.eq.s32.totalorder %s16, 0
      %p125 = por %p123, %p124
      %p126 = scmp.ne.s32.totalorder %s118, %s120
      %p127 = scmp.eq.s32.totalorder %s21, 1
      %p128 = por %p126, %p127
      %p129 = scmp.ne.s32.totalorder %s120, %s121
      %p130 = scmp.eq.s32.totalorder %s21, 0
      %p131 = por %p129, %p130
      %p132 = scmp.ne.s32.totalorder %s120, %s121
      %p133 = scmp.eq.s32.totalorder %s22, 1
      %p134 = por %p132, %p133
      %p136 = scmp.ne.s32.totalorder %s121, %s135
      %p137 = scmp.eq.s32.totalorder %s22, 0
      %p138 = por %p136, %p137
      %s140 = sadd.s32 %s139, 1
      %p143 = scmp.eq.s32.totalorder %s16, 1
      %p144 = scmp.ne.s32.totalorder %s139, %s141
      %p145 = scmp.eq.s32.totalorder %s16, 0
      %p146 = por %p144, %p145
      %p147 = scmp.ne.s32.totalorder %s139, %s141
      %p148 = scmp.eq.s32.totalorder %s21, 1
      %p149 = por %p147, %p148
      %p150 = scmp.ne.s32.totalorder %s141, %s142
      %p151 = scmp.eq.s32.totalorder %s21, 0
      %p152 = por %p150, %p151
      %p153 = scmp.ne.s32.totalorder %s141, %s142
      %p154 = scmp.eq.s32.totalorder %s22, 1
      %p155 = por %p153, %p154
      %p157 = scmp.ne.s32.totalorder %s142, %s156
      %p158 = scmp.eq.s32.totalorder %s22, 0
      %p159 = por %p157, %p158
      %s161 = sadd.s32 %s160, 1
      %p164 = scmp.eq.s32.totalorder %s16, 1
      %p165 = scmp.ne.s32.totalorder %s160, %s162
      %p166 = scmp.eq.s32.totalorder %s16, 0
      %p167 = por %p165, %p166
      %p168 = scmp.ne.s32.totalorder %s160, %s162
      %p169 = scmp.eq.s32.totalorder %s21, 1
      %p170 = por %p168, %p169
      %p171 = scmp.ne.s32.totalorder %s162, %s163
      %p172 = scmp.eq.s32.totalorder %s21, 0
      %p173 = por %p171, %p172
      %p174 = scmp.ne.s32.totalorder %s162, %s163
      %p175 = scmp.eq.s32.totalorder %s22, 1
      %p176 = por %p174, %p175
      %p178 = scmp.ne.s32.totalorder %s163, %s177
      %p179 = scmp.eq.s32.totalorder %s22, 0
      %p180 = por %p178, %p179
      %s181 = ssub.s32 %s16, %s23
      %p182 = scmp.eq.s32.totalorder %s181, 0
      %s184 = sadd.s32 %s183, 1
      %s185 = scalar_select %p182, %s183, %s184
      %p188 = pneg %p182
      %p189 = scmp.eq.s32.totalorder %s16, 1
      %p190 = por %p188, %p189
      %p191 = scmp.ne.s32.totalorder %s183, %s186
      %p192 = scmp.eq.s32.totalorder %s16, 0
      %p193 = por %p191, %p192
      %p194 = scmp.ne.s32.totalorder %s183, %s186
      %p195 = scmp.eq.s32.totalorder %s21, 1
      %p196 = por %p194, %p195
      %p197 = scmp.ne.s32.totalorder %s186, %s187
      %p198 = scmp.eq.s32.totalorder %s21, 0
      %p199 = por %p197, %p198
      %p200 = scmp.ne.s32.totalorder %s186, %s187
      %p201 = scmp.eq.s32.totalorder %s22, 1
      %p202 = por %p200, %p201
      %p204 = scmp.ne.s32.totalorder %s187, %s203
      %p205 = scmp.eq.s32.totalorder %s22, 0
      %p206 = por %p204, %p205
      %p207 = scmp.le.s32.totalorder 1, %s16
      %p208 = scmp.lt.s32.totalorder %s16, 3
      %p209 = pnand %p207, %p208
      %p210 = pneg %p209
      // Predicated region
      $region9: #{tpu_custom_call.1} parent=5 // pred_check
        _
      $region10: #{tpu_custom_call.1} parent=5 // pred_check_branch
        %212 = sbr.rel (%p209) target = $region12
      $region11: #{tpu_custom_call.1} parent=5 // pred_region
        %s213 = ssub.s32 %s16, 1
        // Predicated region
        $region13: #{tpu_custom_call.1} parent=11 // pred_check
          %p214 = pneg %p89
        $region14: #{tpu_custom_call.1} parent=11 // pred_check_branch
          %216 = sbr.rel (%p214) target = $region16
        $region15: #{tpu_custom_call.1} parent=11 // pred_region
          _
        $region16: #{tpu_custom_call.1} parent=11 // pred_fallthru
          _
        // Predicated region
        $region17: #{tpu_custom_call.1} parent=11 // pred_check
          %p217 = pneg %p110
        $region18: #{tpu_custom_call.1} parent=11 // pred_check_branch
          %219 = sbr.rel (%p217) target = $region20
        $region19: #{tpu_custom_call.1} parent=11 // pred_region
          _
        $region20: #{tpu_custom_call.1} parent=11 // pred_fallthru
          _
        // Predicated region
        $region21: #{tpu_custom_call.1} parent=11 // pred_check
          %p220 = pneg %p131
        $region22: #{tpu_custom_call.1} parent=11 // pred_check_branch
          %222 = sbr.rel (%p220) target = $region24
        $region23: #{tpu_custom_call.1} parent=11 // pred_region
          _
        $region24: #{tpu_custom_call.1} parent=11 // pred_fallthru
          _
        // Predicated region
        $region25: #{tpu_custom_call.1} parent=11 // pred_check
          %p223 = pneg %p152
        $region26: #{tpu_custom_call.1} parent=11 // pred_check_branch
          %225 = sbr.rel (%p223) target = $region28
        $region27: #{tpu_custom_call.1} parent=11 // pred_region
          _
        $region28: #{tpu_custom_call.1} parent=11 // pred_fallthru
          _
        // Predicated region
        $region29: #{tpu_custom_call.1} parent=11 // pred_check
          %p226 = pneg %p173
        $region30: #{tpu_custom_call.1} parent=11 // pred_check_branch
          %228 = sbr.rel (%p226) target = $region32
        $region31: #{tpu_custom_call.1} parent=11 // pred_region
          _
        $region32: #{tpu_custom_call.1} parent=11 // pred_fallthru
          _
      $region12: #{tpu_custom_call.1} parent=5 // pred_fallthru
        _
      %p229 = scmp.lt.s32.totalorder %s16, 2
      // Predicated region
      $region33: #{tpu_custom_call.1} parent=5 // pred_check
        %p230 = pneg %p229
      $region34: #{tpu_custom_call.1} parent=5 // pred_check_branch
        %232 = sbr.rel (%p230) target = $region36
      $region35: #{tpu_custom_call.1} parent=5 // pred_region
        // Predicated region
        $region37: #{tpu_custom_call.1} parent=35 // pred_check
          %p233 = pneg %p36
        $region38: #{tpu_custom_call.1} parent=35 // pred_check_branch
          %235 = sbr.rel (%p233) target = $region40
        $region39: #{tpu_custom_call.1} parent=35 // pred_region
          %p236 = scmp.lt.s32.totalorder %s16, 1
          %s237 = scalar_select %p236, %s16, 1
          %s238 = smul.addr %s237, 2
          %s239 = smul.addr %s238, 4
          %s240 = scalar_lea.vmem %s0, %s239
        $region40: #{tpu_custom_call.1} parent=35 // pred_fallthru
          _
        // Predicated region
        $region41: #{tpu_custom_call.1} parent=35 // pred_check
          %p241 = pneg %p62
        $region42: #{tpu_custom_call.1} parent=35 // pred_check_branch
          %243 = sbr.rel (%p241) target = $region44
        $region43: #{tpu_custom_call.1} parent=35 // pred_region
          %p244 = scmp.lt.s32.totalorder %s16, 1
          %s245 = scalar_select %p244, %s16, 1
          %s246 = smul.addr %s245, 8
          %s247 = smul.addr %s246, 4
          %s248 = scalar_lea.vmem %s1, %s247
        $region44: #{tpu_custom_call.1} parent=35 // pred_fallthru
          _
      $region36: #{tpu_custom_call.1} parent=5 // pred_fallthru
        _
      %p249 = scmp.le.s32.totalorder 1, %s16
      %p250 = scmp.lt.s32.totalorder %s16, 3
      %p251 = pnand %p249, %p250
      %p252 = pneg %p251
      // Predicated region
      $region45: #{tpu_custom_call.1} parent=5 // pred_check
        _
      $region46: #{tpu_custom_call.1} parent=5 // pred_check_branch
        %254 = sbr.rel (%p251) target = $region48
      $region47: #{tpu_custom_call.1} parent=5 // pred_region
        %s255 = ssub.s32 %s16, 1
        %p256 = scmp.lt.s32.totalorder %s21, 1
        %s257 = scalar_select %p256, %s21, 1
        %s258 = smul.addr %s257, 2
        %s259 = smul.addr %s258, 4
        %s260 = scalar_lea.vmem %s0, %s259
        %p261 = pneg %p42
        %p262 = pneg %p39
        %p263 = scmp.lt.s32.totalorder %s21, 1
        %s264 = scalar_select %p263, %s21, 1
        %s265 = smul.addr %s264, 8
        %s266 = smul.addr %s265, 4
        %s267 = scalar_lea.vmem %s1, %s266
        %p268 = pneg %p68
        %p269 = pneg %p65
        %p270 = pneg %p89
        %p271 = pneg %p86
        %p272 = pneg %p110
        %p273 = pneg %p107
        %p274 = pneg %p131
        %p275 = pneg %p128
        %p276 = pneg %p152
        %p277 = pneg %p149
        %p278 = pneg %p173
        %p279 = pneg %p170
        %p280 = pneg %p199
        %p281 = pneg %p196
        %s282 = sand.u32 %s186, 1
        %s283 = scalar_lea.sflag [#allocation3], %s282
        %s284 = sand.u32 %s186, 1
        %s285 = smul.addr %s284, 8
        %s286 = scalar_lea.vmem [#allocation2], %s285
        %p287 = scmp.lt.s32.totalorder %s21, 1
        %s288 = scalar_select %p287, %s21, 1
        %s289 = smul.addr %s288, 2
        %s290 = smul.addr %s289, 4
        %s291 = scalar_lea.vmem %s0, %s290
        %p292 = scmp.lt.s32.totalorder %s21, 1
        %s293 = scalar_select %p292, %s21, 1
        %s294 = smul.addr %s293, 8
        %s295 = smul.addr %s294, 4
        %s296 = scalar_lea.vmem %s1, %s295
        %v298 = vld [vmem:[%s3] sm:$0xf]
        %v299 = vld [vmem:[%s3 + $0x4] sm:$0xf]
        %v300 = vld [vmem:[%s3 + $0x8] sm:$0xf]
        %v301 = vld [vmem:[%s3 + $0xc] sm:$0xf]
        %v302 = vld [vmem:[%s3 + $0x10] sm:$0xf]
        %v303 = vld [vmem:[%s3 + $0x14] sm:$0xf]
        %v304 = vld [vmem:[%s3 + $0x18] sm:$0xf]
        %v305 = vld [vmem:[%s3 + $0x1c] sm:$0xf]
        %v306 = vld [vmem:[%s3 + $0x20] sm:$0xf]
        %v307 = vld [vmem:[%s3 + $0x24] sm:$0xf]
        %v308 = vld [vmem:[%s3 + $0x28] sm:$0xf]
        %v309 = vld [vmem:[%s3 + $0x2c] sm:$0xf]
        %v310 = vld [vmem:[%s3 + $0x30] sm:$0xf]
        %v311 = vld [vmem:[%s3 + $0x34] sm:$0xf]
        %v312 = vld [vmem:[%s3 + $0x38] sm:$0xf]
        %v313 = vld [vmem:[%s3 + $0x3c] sm:$0xf]
        %v314 = vld [vmem:[%s296] sm:$0xff]
        %v315 = vld [vmem:[%s296 + $0x8] sm:$0xff]
        %v316 = vld [vmem:[%s296 + $0x10] sm:$0xff]
        %v317 = vld [vmem:[%s296 + $0x18] sm:$0x33]
        %v318 = vld [vmem:[%s4] sm:$0xff]
        %v319 = vld [vmem:[%s4 + $0x8] sm:$0xff]
        %v320 = vld [vmem:[%s4 + $0x10] sm:$0xff]
        %v321 = vld [vmem:[%s4 + $0x18] sm:$0xff]
        %v322 = vld [vmem:[%s4 + $0x20] sm:$0xff]
        %v323 = vld [vmem:[%s4 + $0x28] sm:$0xff]
        %v324 = vld [vmem:[%s4 + $0x30] sm:$0xff]
        %v325 = vld [vmem:[%s4 + $0x38] sm:$0xff]
        %v326 = vld [vmem:[%s4 + $0x40] sm:$0xff]
        %v327 = vld [vmem:[%s4 + $0x48] sm:$0xff]
        %v328 = vld [vmem:[%s4 + $0x50] sm:$0xff]
        %v329 = vld [vmem:[%s4 + $0x58] sm:$0xff]
        %v330 = vld [vmem:[%s4 + $0x60] sm:$0xff]
        %v331 = vld [vmem:[%s4 + $0x68] sm:$0xff]
        %v332 = vld [vmem:[%s4 + $0x70] sm:$0xff]
        %v333 = vld [vmem:[%s4 + $0x78] sm:$0xff]
        %335 = vset.pattern.permute.xlu0 0
        %336 = vperm.xlu0 %335, %v318
        %v337 = vpop.permute.xlu0 %336
        %340 = vset.pattern.permute.xlu0 0
        %341 = vperm.xlu0 %340, %v319
        %v342 = vpop.permute.xlu0 %341
        %345 = vset.pattern.permute.xlu0 0
        %346 = vperm.xlu0 %345, %v320
        %v347 = vpop.permute.xlu0 %346
        %350 = vset.pattern.permute.xlu0 0
        %351 = vperm.xlu0 %350, %v321
        %v352 = vpop.permute.xlu0 %351
        %355 = vset.pattern.permute.xlu0 0
        %356 = vperm.xlu0 %355, %v322
        %v357 = vpop.permute.xlu0 %356
        %360 = vset.pattern.permute.xlu0 0
        %361 = vperm.xlu0 %360, %v323
        %v362 = vpop.permute.xlu0 %361
        %365 = vset.pattern.permute.xlu0 0
        %366 = vperm.xlu0 %365, %v324
        %v367 = vpop.permute.xlu0 %366
        %370 = vset.pattern.permute.xlu0 0
        %371 = vperm.xlu0 %370, %v325
        %v372 = vpop.permute.xlu0 %371
        %375 = vset.pattern.permute.xlu0 0
        %376 = vperm.xlu0 %375, %v326
        %v377 = vpop.permute.xlu0 %376
        %380 = vset.pattern.permute.xlu0 0
        %381 = vperm.xlu0 %380, %v327
        %v382 = vpop.permute.xlu0 %381
        %385 = vset.pattern.permute.xlu0 0
        %386 = vperm.xlu0 %385, %v328
        %v387 = vpop.permute.xlu0 %386
        %390 = vset.pattern.permute.xlu0 0
        %391 = vperm.xlu0 %390, %v329
        %v392 = vpop.permute.xlu0 %391
        %395 = vset.pattern.permute.xlu0 0
        %396 = vperm.xlu0 %395, %v330
        %v397 = vpop.permute.xlu0 %396
        %400 = vset.pattern.permute.xlu0 0
        %401 = vperm.xlu0 %400, %v331
        %v402 = vpop.permute.xlu0 %401
        %405 = vset.pattern.permute.xlu0 0
        %406 = vperm.xlu0 %405, %v332
        %v407 = vpop.permute.xlu0 %406
        %410 = vset.pattern.permute.xlu0 0
        %411 = vperm.xlu0 %410, %v333
        %v412 = vpop.permute.xlu0 %411
        %v430 = vunpack.c.l.b16 %v298
        %v431 = vunpack.c.l.b16 %v299
        %v432 = vunpack.c.l.b16 %v300
        %v433 = vunpack.c.l.b16 %v301
        %v434 = vunpack.c.l.b16 %v302
        %v435 = vunpack.c.l.b16 %v303
        %v436 = vunpack.c.l.b16 %v304
        %v437 = vunpack.c.l.b16 %v305
        %v438 = vunpack.c.l.b16 %v306
        %v439 = vunpack.c.l.b16 %v307
        %v440 = vunpack.c.l.b16 %v308
        %v441 = vunpack.c.l.b16 %v309
        %v442 = vunpack.c.l.b16 %v310
        %v443 = vunpack.c.l.b16 %v311
        %v444 = vunpack.c.l.b16 %v312
        %v445 = vunpack.c.l.b16 %v313
        %v446 = vpack.c.b16 %v431, %v430
        %v447 = vpack.c.b16 %v433, %v432
        %v448 = vpack.c.b16 %v435, %v434
        %v449 = vpack.c.b16 %v437, %v436
        %v450 = vpack.c.b16 %v439, %v438
        %v451 = vpack.c.b16 %v441, %v440
        %v452 = vpack.c.b16 %v443, %v442
        %v453 = vpack.c.b16 %v445, %v444
        %v458 = vunpack.c.l.b16 %v314
        %v459 = vunpack.c.h.b16 %v314
        %v460 = vunpack.c.l.b16 %v315
        %v461 = vunpack.c.h.b16 %v315
        %v462 = vunpack.c.l.b16 %v316
        %v463 = vunpack.c.h.b16 %v316
        %v464 = vunpack.c.l.b16 %v317
        %v465 = vunpack.c.h.b16 %v317
        %v466 = vpack.c.b16 %v460, %v458
        %v467 = vpack.c.b16 %v461, %v459
        %v468 = vpack.c.b16 %v464, %v462
        %v469 = vpack.c.b16 %v465, %v463
        %vm472 = vcmask 220160
        %v474 = vsel %vm472, %v446, 0
        %v477 = vsel %vm472, %v447, 0
        %v480 = vsel %vm472, %v448, 0
        %v483 = vsel %vm472, %v449, 0
        %v486 = vsel %vm472, %v450, 0
        %v489 = vsel %vm472, %v451, 0
        %v492 = vsel %vm472, %v452, 0
        %v495 = vsel %vm472, %v453, 0
        %vm497 = vcmask 1044480
        %vm498 = vcmask 1045504
        %v499 = vsel %vm497, 4294967295, 65535
        %v500 = vsel %vm498, %v499, 0
        %v502 = vand.u32 %v468, %v500
        %v505 = vand.u32 %v469, %v500
        %507 = vmatpush.bf16.msra.mxu0 0
        %508 = vmatpush.bf16.msra.mxu0 0
        %509 = vmatpush.bf16.msra.mxu0 0
        %510 = vmatpush.bf16.msra.mxu0 0
        %511 = vmatpush.bf16.msra.mxu0 0
        %512 = vmatpush.bf16.msra.mxu0 0
        %513 = vmatpush.bf16.msra.mxu0 %v502
        %514 = vmatpush.bf16.msra.mxu0 %v466
        %515 = vmatmul.bf16.gmra.mxu0 %v474
        %v516 = vpop.f32.mrf.mxu0
        %v517 = vadd.f32 %v337, %v516
        %v518 = vpop.f32.mrf.mxu0
        %v519 = vadd.f32 %v342, %v518
        %520 = vmatmul.bf16.gmra.mxu0 %v477
        %v521 = vpop.f32.mrf.mxu0
        %v522 = vadd.f32 %v347, %v521
        %v523 = vpop.f32.mrf.mxu0
        %v524 = vadd.f32 %v352, %v523
        %525 = vmatmul.bf16.gmra.mxu0 %v480
        %v526 = vpop.f32.mrf.mxu0
        %v527 = vadd.f32 %v357, %v526
        %v528 = vpop.f32.mrf.mxu0
        %v529 = vadd.f32 %v362, %v528
        %530 = vmatmul.bf16.gmra.mxu0 %v483
        %v531 = vpop.f32.mrf.mxu0
        %v532 = vadd.f32 %v367, %v531
        %v533 = vpop.f32.mrf.mxu0
        %v534 = vadd.f32 %v372, %v533
        %535 = vmatmul.bf16.gmra.mxu0 %v486
        %v536 = vpop.f32.mrf.mxu0
        %v537 = vadd.f32 %v377, %v536
        %v538 = vpop.f32.mrf.mxu0
        %v539 = vadd.f32 %v382, %v538
        %540 = vmatmul.bf16.gmra.mxu0 %v489
        %v541 = vpop.f32.mrf.mxu0
        %v542 = vadd.f32 %v387, %v541
        %v543 = vpop.f32.mrf.mxu0
        %v544 = vadd.f32 %v392, %v543
        %545 = vmatmul.bf16.gmra.mxu0 %v492
        %v546 = vpop.f32.mrf.mxu0
        %v547 = vadd.f32 %v397, %v546
        %v548 = vpop.f32.mrf.mxu0
        %v549 = vadd.f32 %v402, %v548
        %550 = vmatmul.bf16.gmra.mxu0 %v495
        %v551 = vpop.f32.mrf.mxu0
        %v552 = vadd.f32 %v407, %v551
        %v553 = vpop.f32.mrf.mxu0
        %v554 = vadd.f32 %v412, %v553
        %555 = vdwg.mxu0
        %556 = vmatpush.bf16.msra.mxu0 0
        %557 = vmatpush.bf16.msra.mxu0 0
        %558 = vmatpush.bf16.msra.mxu0 0
        %559 = vmatpush.bf16.msra.mxu0 0
        %560 = vmatpush.bf16.msra.mxu0 0
        %561 = vmatpush.bf16.msra.mxu0 0
        %562 = vmatpush.bf16.msra.mxu0 %v505
        %563 = vmatpush.bf16.msra.mxu0 %v467
        %564 = vmatmul.bf16.gmra.mxu0 %v474
        %v565 = vpop.f32.mrf.mxu0
        %v566 = vadd.f32 %v337, %v565
        %v567 = vpop.f32.mrf.mxu0
        %v568 = vadd.f32 %v342, %v567
        %569 = vmatmul.bf16.gmra.mxu0 %v477
        %v570 = vpop.f32.mrf.mxu0
        %v571 = vadd.f32 %v347, %v570
        %v572 = vpop.f32.mrf.mxu0
        %v573 = vadd.f32 %v352, %v572
        %574 = vmatmul.bf16.gmra.mxu0 %v480
        %v575 = vpop.f32.mrf.mxu0
        %v576 = vadd.f32 %v357, %v575
        %v577 = vpop.f32.mrf.mxu0
        %v578 = vadd.f32 %v362, %v577
        %579 = vmatmul.bf16.gmra.mxu0 %v483
        %v580 = vpop.f32.mrf.mxu0
        %v581 = vadd.f32 %v367, %v580
        %v582 = vpop.f32.mrf.mxu0
        %v583 = vadd.f32 %v372, %v582
        %584 = vmatmul.bf16.gmra.mxu0 %v486
        %v585 = vpop.f32.mrf.mxu0
        %v586 = vadd.f32 %v377, %v585
        %v587 = vpop.f32.mrf.mxu0
        %v588 = vadd.f32 %v382, %v587
        %589 = vmatmul.bf16.gmra.mxu0 %v489
        %v590 = vpop.f32.mrf.mxu0
        %v591 = vadd.f32 %v387, %v590
        %v592 = vpop.f32.mrf.mxu0
        %v593 = vadd.f32 %v392, %v592
        %594 = vmatmul.bf16.gmra.mxu0 %v492
        %v595 = vpop.f32.mrf.mxu0
        %v596 = vadd.f32 %v397, %v595
        %v597 = vpop.f32.mrf.mxu0
        %v598 = vadd.f32 %v402, %v597
        %599 = vmatmul.bf16.gmra.mxu0 %v495
        %v600 = vpop.f32.mrf.mxu0
        %v601 = vadd.f32 %v407, %v600
        %v602 = vpop.f32.mrf.mxu0
        %v603 = vadd.f32 %v412, %v602
        %604 = vdwg.mxu0
        %v605 = vmax.f32 %v517, 0.0
        %v606 = vmax.f32 %v566, 0.0
        %v607 = vmax.f32 %v519, 0.0
        %v608 = vmax.f32 %v568, 0.0
        %v609 = vmax.f32 %v522, 0.0
        %v610 = vmax.f32 %v571, 0.0
        %v611 = vmax.f32 %v524, 0.0
        %v612 = vmax.f32 %v573, 0.0
        %v613 = vmax.f32 %v527, 0.0
        %v614 = vmax.f32 %v576, 0.0
        %v615 = vmax.f32 %v529, 0.0
        %v616 = vmax.f32 %v578, 0.0
        %v617 = vmax.f32 %v532, 0.0
        %v618 = vmax.f32 %v581, 0.0
        %v619 = vmax.f32 %v534, 0.0
        %v620 = vmax.f32 %v583, 0.0
        %v621 = vmax.f32 %v537, 0.0
        %v622 = vmax.f32 %v586, 0.0
        %v623 = vmax.f32 %v539, 0.0
        %v624 = vmax.f32 %v588, 0.0
        %v625 = vmax.f32 %v542, 0.0
        %v626 = vmax.f32 %v591, 0.0
        %v627 = vmax.f32 %v544, 0.0
        %v628 = vmax.f32 %v593, 0.0
        %v629 = vmax.f32 %v547, 0.0
        %v630 = vmax.f32 %v596, 0.0
        %v631 = vmax.f32 %v549, 0.0
        %v632 = vmax.f32 %v598, 0.0
        %v633 = vmax.f32 %v552, 0.0
        %v634 = vmax.f32 %v601, 0.0
        %v635 = vmax.f32 %v554, 0.0
        %v636 = vmax.f32 %v603, 0.0
        %v637 = vpack.c.bf16 %v606, %v605
        %v638 = vpack.c.bf16 %v608, %v607
        %v639 = vpack.c.bf16 %v610, %v609
        %v640 = vpack.c.bf16 %v612, %v611
        %v641 = vpack.c.bf16 %v614, %v613
        %v642 = vpack.c.bf16 %v616, %v615
        %v643 = vpack.c.bf16 %v618, %v617
        %v644 = vpack.c.bf16 %v620, %v619
        %v645 = vpack.c.bf16 %v622, %v621
        %v646 = vpack.c.bf16 %v624, %v623
        %v647 = vpack.c.bf16 %v626, %v625
        %v648 = vpack.c.bf16 %v628, %v627
        %v649 = vpack.c.bf16 %v630, %v629
        %v650 = vpack.c.bf16 %v632, %v631
        %v651 = vpack.c.bf16 %v634, %v633
        %v652 = vpack.c.bf16 %v636, %v635
        %v669 = vunpack.c.h.b16 %v637
        %v670 = vunpack.c.h.b16 %v638
        %v671 = vunpack.c.h.b16 %v639
        %v672 = vunpack.c.h.b16 %v640
        %v673 = vunpack.c.h.b16 %v641
        %v674 = vunpack.c.h.b16 %v642
        %v675 = vunpack.c.h.b16 %v643
        %v676 = vunpack.c.h.b16 %v644
        %v677 = vunpack.c.h.b16 %v645
        %v678 = vunpack.c.h.b16 %v646
        %v679 = vunpack.c.h.b16 %v647
        %v680 = vunpack.c.h.b16 %v648
        %v681 = vunpack.c.h.b16 %v649
        %v682 = vunpack.c.h.b16 %v650
        %v683 = vunpack.c.h.b16 %v651
        %v684 = vunpack.c.h.b16 %v652
        %v685 = vpack.c.b16 %v670, %v669
        %v686 = vpack.c.b16 %v672, %v671
        %v687 = vpack.c.b16 %v674, %v673
        %v688 = vpack.c.b16 %v676, %v675
        %v689 = vpack.c.b16 %v678, %v677
        %v690 = vpack.c.b16 %v680, %v679
        %v691 = vpack.c.b16 %v682, %v681
        %v692 = vpack.c.b16 %v684, %v683
        %693 = vrot.lane.b32.xlu0 %v685, 17
        %v694 = vpop.permute.xlu0 %693
        %695 = vrot.lane.b32.xlu0 %v686, 17
        %v696 = vpop.permute.xlu0 %695
        %697 = vrot.lane.b32.xlu0 %v687, 17
        %v698 = vpop.permute.xlu0 %697
        %699 = vrot.lane.b32.xlu0 %v688, 17
        %v700 = vpop.permute.xlu0 %699
        %701 = vrot.lane.b32.xlu0 %v689, 17
        %v702 = vpop.permute.xlu0 %701
        %703 = vrot.lane.b32.xlu0 %v690, 17
        %v704 = vpop.permute.xlu0 %703
        %705 = vrot.lane.b32.xlu0 %v691, 17
        %v706 = vpop.permute.xlu0 %705
        %707 = vrot.lane.b32.xlu0 %v692, 17
        %v708 = vpop.permute.xlu0 %707
        %v709 = vunpack.c.l.b16 %v637
        %v710 = vunpack.c.l.b16 %v638
        %v711 = vunpack.c.l.b16 %v639
        %v712 = vunpack.c.l.b16 %v640
        %v713 = vunpack.c.l.b16 %v641
        %v714 = vunpack.c.l.b16 %v642
        %v715 = vunpack.c.l.b16 %v643
        %v716 = vunpack.c.l.b16 %v644
        %v717 = vunpack.c.l.b16 %v645
        %v718 = vunpack.c.l.b16 %v646
        %v719 = vunpack.c.l.b16 %v647
        %v720 = vunpack.c.l.b16 %v648
        %v721 = vunpack.c.l.b16 %v649
        %v722 = vunpack.c.l.b16 %v650
        %v723 = vunpack.c.l.b16 %v651
        %v724 = vunpack.c.l.b16 %v652
        %v725 = vpack.c.b16 %v710, %v709
        %v726 = vpack.c.b16 %v712, %v711
        %v727 = vpack.c.b16 %v714, %v713
        %v728 = vpack.c.b16 %v716, %v715
        %v729 = vpack.c.b16 %v718, %v717
        %v730 = vpack.c.b16 %v720, %v719
        %v731 = vpack.c.b16 %v722, %v721
        %v732 = vpack.c.b16 %v724, %v723
        %733 = vrot.lane.b32.xlu0 %v725, 17
        %v734 = vpop.permute.xlu0 %733
        %735 = vrot.lane.b32.xlu0 %v726, 17
        %v736 = vpop.permute.xlu0 %735
        %737 = vrot.lane.b32.xlu0 %v727, 17
        %v738 = vpop.permute.xlu0 %737
        %739 = vrot.lane.b32.xlu0 %v728, 17
        %v740 = vpop.permute.xlu0 %739
        %741 = vrot.lane.b32.xlu0 %v729, 17
        %v742 = vpop.permute.xlu0 %741
        %743 = vrot.lane.b32.xlu0 %v730, 17
        %v744 = vpop.permute.xlu0 %743
        %745 = vrot.lane.b32.xlu0 %v731, 17
        %v746 = vpop.permute.xlu0 %745
        %747 = vrot.lane.b32.xlu0 %v732, 17
        %v748 = vpop.permute.xlu0 %747
        %vm749 = vcmask 138240
        %v750 = vsel %vm749, %v734, %v694
        %v751 = vsel %vm749, %v736, %v696
        %v752 = vsel %vm749, %v738, %v698
        %v753 = vsel %vm749, %v740, %v700
        %v754 = vsel %vm749, %v742, %v702
        %v755 = vsel %vm749, %v744, %v704
        %v756 = vsel %vm749, %v746, %v706
        %v757 = vsel %vm749, %v748, %v708
        %vm766 = vcmask 138240
        %v769 = vsel %vm766, %v694, %v734
        %v773 = vsel %vm766, %v696, %v736
        %v777 = vsel %vm766, %v698, %v738
        %v781 = vsel %vm766, %v700, %v740
        %v785 = vsel %vm766, %v702, %v742
        %v789 = vsel %vm766, %v704, %v744
        %v793 = vsel %vm766, %v706, %v746
        %v797 = vsel %vm766, %v708, %v748
        %v799 = vld [vmem:[%s2] sm:$0x11]
        %v801 = vunpack.c.l.b16 %v799
        %v802 = vunpack.c.h.b16 %v799
        %v803 = vpack.c.b16 %v801, %v801
        %v804 = vpack.c.b16 %v802, %v802
        %v806 = vpack.i.b16 %v803, %v803
        %v808 = vperm.slane %v806, 0
        %v810 = vpack.i.b16 %v804, %v804
        %v812 = vperm.slane %v810, 0
        %v813 = vunpack.c.l.bf16 %v769
        %v814 = vunpack.c.l.bf16 %v750
        %v815 = vunpack.c.h.bf16 %v769
        %v816 = vunpack.c.h.bf16 %v750
        %v817 = vunpack.c.l.bf16 %v773
        %v818 = vunpack.c.l.bf16 %v751
        %v819 = vunpack.c.h.bf16 %v773
        %v820 = vunpack.c.h.bf16 %v751
        %v821 = vunpack.c.l.bf16 %v777
        %v822 = vunpack.c.l.bf16 %v752
        %v823 = vunpack.c.h.bf16 %v777
        %v824 = vunpack.c.h.bf16 %v752
        %v825 = vunpack.c.l.bf16 %v781
        %v826 = vunpack.c.l.bf16 %v753
        %v827 = vunpack.c.h.bf16 %v781
        %v828 = vunpack.c.h.bf16 %v753
        %v829 = vunpack.c.l.bf16 %v785
        %v830 = vunpack.c.l.bf16 %v754
        %v831 = vunpack.c.h.bf16 %v785
        %v832 = vunpack.c.h.bf16 %v754
        %v833 = vunpack.c.l.bf16 %v789
        %v834 = vunpack.c.l.bf16 %v755
        %v835 = vunpack.c.h.bf16 %v789
        %v836 = vunpack.c.h.bf16 %v755
        %v837 = vunpack.c.l.bf16 %v793
        %v838 = vunpack.c.l.bf16 %v756
        %v839 = vunpack.c.h.bf16 %v793
        %v840 = vunpack.c.h.bf16 %v756
        %v841 = vunpack.c.l.bf16 %v797
        %v842 = vunpack.c.l.bf16 %v757
        %v843 = vunpack.c.h.bf16 %v797
        %v844 = vunpack.c.h.bf16 %v757
        %v845 = vunpack.c.l.bf16 %v808
        %v846 = vunpack.c.l.bf16 %v812
        %v847 = vmul.f32 %v813, %v845
        %v848 = vmul.f32 %v814, %v846
        %v849 = vmul.f32 %v815, %v845
        %v850 = vmul.f32 %v816, %v846
        %v851 = vmul.f32 %v817, %v845
        %v852 = vmul.f32 %v818, %v846
        %v853 = vmul.f32 %v819, %v845
        %v854 = vmul.f32 %v820, %v846
        %v855 = vmul.f32 %v821, %v845
        %v856 = vmul.f32 %v822, %v846
        %v857 = vmul.f32 %v823, %v845
        %v858 = vmul.f32 %v824, %v846
        %v859 = vmul.f32 %v825, %v845
        %v860 = vmul.f32 %v826, %v846
        %v861 = vmul.f32 %v827, %v845
        %v862 = vmul.f32 %v828, %v846
        %v863 = vmul.f32 %v829, %v845
        %v864 = vmul.f32 %v830, %v846
        %v865 = vmul.f32 %v831, %v845
        %v866 = vmul.f32 %v832, %v846
        %v867 = vmul.f32 %v833, %v845
        %v868 = vmul.f32 %v834, %v846
        %v869 = vmul.f32 %v835, %v845
        %v870 = vmul.f32 %v836, %v846
        %v871 = vmul.f32 %v837, %v845
        %v872 = vmul.f32 %v838, %v846
        %v873 = vmul.f32 %v839, %v845
        %v874 = vmul.f32 %v840, %v846
        %v875 = vmul.f32 %v841, %v845
        %v876 = vmul.f32 %v842, %v846
        %v877 = vmul.f32 %v843, %v845
        %v878 = vmul.f32 %v844, %v846
        %v879 = vpack.c.bf16 %v848, %v847
        %v880 = vpack.c.bf16 %v850, %v849
        %v881 = vpack.c.bf16 %v852, %v851
        %v882 = vpack.c.bf16 %v854, %v853
        %v883 = vpack.c.bf16 %v856, %v855
        %v884 = vpack.c.bf16 %v858, %v857
        %v885 = vpack.c.bf16 %v860, %v859
        %v886 = vpack.c.bf16 %v862, %v861
        %v887 = vpack.c.bf16 %v864, %v863
        %v888 = vpack.c.bf16 %v866, %v865
        %v889 = vpack.c.bf16 %v868, %v867
        %v890 = vpack.c.bf16 %v870, %v869
        %v891 = vpack.c.bf16 %v872, %v871
        %v892 = vpack.c.bf16 %v874, %v873
        %v893 = vpack.c.bf16 %v876, %v875
        %v894 = vpack.c.bf16 %v878, %v877
        %895 = vrot.lane.b32.xlu0 %v685, 16
        %v896 = vpop.permute.xlu0 %895
        %897 = vrot.lane.b32.xlu0 %v686, 16
        %v898 = vpop.permute.xlu0 %897
        %899 = vrot.lane.b32.xlu0 %v687, 16
        %v900 = vpop.permute.xlu0 %899
        %901 = vrot.lane.b32.xlu0 %v688, 16
        %v902 = vpop.permute.xlu0 %901
        %903 = vrot.lane.b32.xlu0 %v689, 16
        %v904 = vpop.permute.xlu0 %903
        %905 = vrot.lane.b32.xlu0 %v690, 16
        %v906 = vpop.permute.xlu0 %905
        %907 = vrot.lane.b32.xlu0 %v691, 16
        %v908 = vpop.permute.xlu0 %907
        %909 = vrot.lane.b32.xlu0 %v692, 16
        %v910 = vpop.permute.xlu0 %909
        %911 = vrot.lane.b32.xlu0 %v725, 16
        %v912 = vpop.permute.xlu0 %911
        %913 = vrot.lane.b32.xlu0 %v726, 16
        %v914 = vpop.permute.xlu0 %913
        %915 = vrot.lane.b32.xlu0 %v727, 16
        %v916 = vpop.permute.xlu0 %915
        %917 = vrot.lane.b32.xlu0 %v728, 16
        %v918 = vpop.permute.xlu0 %917
        %919 = vrot.lane.b32.xlu0 %v729, 16
        %v920 = vpop.permute.xlu0 %919
        %921 = vrot.lane.b32.xlu0 %v730, 16
        %v922 = vpop.permute.xlu0 %921
        %923 = vrot.lane.b32.xlu0 %v731, 16
        %v924 = vpop.permute.xlu0 %923
        %925 = vrot.lane.b32.xlu0 %v732, 16
        %v926 = vpop.permute.xlu0 %925
        %vm927 = vcmask 130048
        %v928 = vsel %vm927, %v912, %v896
        %v929 = vsel %vm927, %v914, %v898
        %v930 = vsel %vm927, %v916, %v900
        %v931 = vsel %vm927, %v918, %v902
        %v932 = vsel %vm927, %v920, %v904
        %v933 = vsel %vm927, %v922, %v906
        %v934 = vsel %vm927, %v924, %v908
        %v935 = vsel %vm927, %v926, %v910
        %vm944 = vcmask 130048
        %v947 = vsel %vm944, %v896, %v912
        %v951 = vsel %vm944, %v898, %v914
        %v955 = vsel %vm944, %v900, %v916
        %v959 = vsel %vm944, %v902, %v918
        %v963 = vsel %vm944, %v904, %v920
        %v967 = vsel %vm944, %v906, %v922
        %v971 = vsel %vm944, %v908, %v924
        %v975 = vsel %vm944, %v910, %v926
        %v977 = vshrl.u32 %v803, 16
        %v978 = vpack.i.b16 %v977, %v977
        %v980 = vperm.slane %v978, 0
        %v981 = vshrl.u32 %v804, 16
        %v982 = vpack.i.b16 %v981, %v981
        %v984 = vperm.slane %v982, 0
        %v985 = vunpack.c.l.bf16 %v947
        %v986 = vunpack.c.l.bf16 %v928
        %v987 = vunpack.c.h.bf16 %v947
        %v988 = vunpack.c.h.bf16 %v928
        %v989 = vunpack.c.l.bf16 %v951
        %v990 = vunpack.c.l.bf16 %v929
        %v991 = vunpack.c.h.bf16 %v951
        %v992 = vunpack.c.h.bf16 %v929
        %v993 = vunpack.c.l.bf16 %v955
        %v994 = vunpack.c.l.bf16 %v930
        %v995 = vunpack.c.h.bf16 %v955
        %v996 = vunpack.c.h.bf16 %v930
        %v997 = vunpack.c.l.bf16 %v959
        %v998 = vunpack.c.l.bf16 %v931
        %v999 = vunpack.c.h.bf16 %v959
        %v1000 = vunpack.c.h.bf16 %v931
        %v1001 = vunpack.c.l.bf16 %v963
        %v1002 = vunpack.c.l.bf16 %v932
        %v1003 = vunpack.c.h.bf16 %v963
        %v1004 = vunpack.c.h.bf16 %v932
        %v1005 = vunpack.c.l.bf16 %v967
        %v1006 = vunpack.c.l.bf16 %v933
        %v1007 = vunpack.c.h.bf16 %v967
        %v1008 = vunpack.c.h.bf16 %v933
        %v1009 = vunpack.c.l.bf16 %v971
        %v1010 = vunpack.c.l.bf16 %v934
        %v1011 = vunpack.c.h.bf16 %v971
        %v1012 = vunpack.c.h.bf16 %v934
        %v1013 = vunpack.c.l.bf16 %v975
        %v1014 = vunpack.c.l.bf16 %v935
        %v1015 = vunpack.c.h.bf16 %v975
        %v1016 = vunpack.c.h.bf16 %v935
        %v1017 = vunpack.c.l.bf16 %v980
        %v1018 = vunpack.c.l.bf16 %v984
        %v1019 = vmul.f32 %v985, %v1017
        %v1020 = vmul.f32 %v986, %v1018
        %v1021 = vmul.f32 %v987, %v1017
        %v1022 = vmul.f32 %v988, %v1018
        %v1023 = vmul.f32 %v989, %v1017
        %v1024 = vmul.f32 %v990, %v1018
        %v1025 = vmul.f32 %v991, %v1017
        %v1026 = vmul.f32 %v992, %v1018
        %v1027 = vmul.f32 %v993, %v1017
        %v1028 = vmul.f32 %v994, %v1018
        %v1029 = vmul.f32 %v995, %v1017
        %v1030 = vmul.f32 %v996, %v1018
        %v1031 = vmul.f32 %v997, %v1017
        %v1032 = vmul.f32 %v998, %v1018
        %v1033 = vmul.f32 %v999, %v1017
        %v1034 = vmul.f32 %v1000, %v1018
        %v1035 = vmul.f32 %v1001, %v1017
        %v1036 = vmul.f32 %v1002, %v1018
        %v1037 = vmul.f32 %v1003, %v1017
        %v1038 = vmul.f32 %v1004, %v1018
        %v1039 = vmul.f32 %v1005, %v1017
        %v1040 = vmul.f32 %v1006, %v1018
        %v1041 = vmul.f32 %v1007, %v1017
        %v1042 = vmul.f32 %v1008, %v1018
        %v1043 = vmul.f32 %v1009, %v1017
        %v1044 = vmul.f32 %v1010, %v1018
        %v1045 = vmul.f32 %v1011, %v1017
        %v1046 = vmul.f32 %v1012, %v1018
        %v1047 = vmul.f32 %v1013, %v1017
        %v1048 = vmul.f32 %v1014, %v1018
        %v1049 = vmul.f32 %v1015, %v1017
        %v1050 = vmul.f32 %v1016, %v1018
        %v1051 = vpack.c.bf16 %v1020, %v1019
        %v1052 = vpack.c.bf16 %v1022, %v1021
        %v1053 = vpack.c.bf16 %v1024, %v1023
        %v1054 = vpack.c.bf16 %v1026, %v1025
        %v1055 = vpack.c.bf16 %v1028, %v1027
        %v1056 = vpack.c.bf16 %v1030, %v1029
        %v1057 = vpack.c.bf16 %v1032, %v1031
        %v1058 = vpack.c.bf16 %v1034, %v1033
        %v1059 = vpack.c.bf16 %v1036, %v1035
        %v1060 = vpack.c.bf16 %v1038, %v1037
        %v1061 = vpack.c.bf16 %v1040, %v1039
        %v1062 = vpack.c.bf16 %v1042, %v1041
        %v1063 = vpack.c.bf16 %v1044, %v1043
        %v1064 = vpack.c.bf16 %v1046, %v1045
        %v1065 = vpack.c.bf16 %v1048, %v1047
        %v1066 = vpack.c.bf16 %v1050, %v1049
        %1067 = vrot.lane.b32.xlu0 %v685, 15
        %v1068 = vpop.permute.xlu0 %1067
        %1069 = vrot.lane.b32.xlu0 %v686, 15
        %v1070 = vpop.permute.xlu0 %1069
        %1071 = vrot.lane.b32.xlu0 %v687, 15
        %v1072 = vpop.permute.xlu0 %1071
        %1073 = vrot.lane.b32.xlu0 %v688, 15
        %v1074 = vpop.permute.xlu0 %1073
        %1075 = vrot.lane.b32.xlu0 %v689, 15
        %v1076 = vpop.permute.xlu0 %1075
        %1077 = vrot.lane.b32.xlu0 %v690, 15
        %v1078 = vpop.permute.xlu0 %1077
        %1079 = vrot.lane.b32.xlu0 %v691, 15
        %v1080 = vpop.permute.xlu0 %1079
        %1081 = vrot.lane.b32.xlu0 %v692, 15
        %v1082 = vpop.permute.xlu0 %1081
        %1083 = vrot.lane.b32.xlu0 %v725, 15
        %v1084 = vpop.permute.xlu0 %1083
        %1085 = vrot.lane.b32.xlu0 %v726, 15
        %v1086 = vpop.permute.xlu0 %1085
        %1087 = vrot.lane.b32.xlu0 %v727, 15
        %v1088 = vpop.permute.xlu0 %1087
        %1089 = vrot.lane.b32.xlu0 %v728, 15
        %v1090 = vpop.permute.xlu0 %1089
        %1091 = vrot.lane.b32.xlu0 %v729, 15
        %v1092 = vpop.permute.xlu0 %1091
        %1093 = vrot.lane.b32.xlu0 %v730, 15
        %v1094 = vpop.permute.xlu0 %1093
        %1095 = vrot.lane.b32.xlu0 %v731, 15
        %v1096 = vpop.permute.xlu0 %1095
        %1097 = vrot.lane.b32.xlu0 %v732, 15
        %v1098 = vpop.permute.xlu0 %1097
        %vm1099 = vcmask 121856
        %v1100 = vsel %vm1099, %v1084, %v1068
        %v1101 = vsel %vm1099, %v1086, %v1070
        %v1102 = vsel %vm1099, %v1088, %v1072
        %v1103 = vsel %vm1099, %v1090, %v1074
        %v1104 = vsel %vm1099, %v1092, %v1076
        %v1105 = vsel %vm1099, %v1094, %v1078
        %v1106 = vsel %vm1099, %v1096, %v1080
        %v1107 = vsel %vm1099, %v1098, %v1082
        %vm1116 = vcmask 121856
        %v1119 = vsel %vm1116, %v1068, %v1084
        %v1123 = vsel %vm1116, %v1070, %v1086
        %v1127 = vsel %vm1116, %v1072, %v1088
        %v1131 = vsel %vm1116, %v1074, %v1090
        %v1135 = vsel %vm1116, %v1076, %v1092
        %v1139 = vsel %vm1116, %v1078, %v1094
        %v1143 = vsel %vm1116, %v1080, %v1096
        %v1147 = vsel %vm1116, %v1082, %v1098
        %v1149 = vld [vmem:[%s2] sm:$0x22]
        %v1151 = vunpack.c.l.b16 %v1149
        %v1152 = vunpack.c.h.b16 %v1149
        %v1153 = vpack.c.b16 %v1151, %v1151
        %v1154 = vpack.c.b16 %v1152, %v1152
        %v1156 = vpack.i.b16 %v1153, %v1153
        %v1158 = vperm.slane %v1156, 1
        %v1160 = vpack.i.b16 %v1154, %v1154
        %v1162 = vperm.slane %v1160, 1
        %v1163 = vunpack.c.l.bf16 %v1119
        %v1164 = vunpack.c.l.bf16 %v1100
        %v1165 = vunpack.c.h.bf16 %v1119
        %v1166 = vunpack.c.h.bf16 %v1100
        %v1167 = vunpack.c.l.bf16 %v1123
        %v1168 = vunpack.c.l.bf16 %v1101
        %v1169 = vunpack.c.h.bf16 %v1123
        %v1170 = vunpack.c.h.bf16 %v1101
        %v1171 = vunpack.c.l.bf16 %v1127
        %v1172 = vunpack.c.l.bf16 %v1102
        %v1173 = vunpack.c.h.bf16 %v1127
        %v1174 = vunpack.c.h.bf16 %v1102
        %v1175 = vunpack.c.l.bf16 %v1131
        %v1176 = vunpack.c.l.bf16 %v1103
        %v1177 = vunpack.c.h.bf16 %v1131
        %v1178 = vunpack.c.h.bf16 %v1103
        %v1179 = vunpack.c.l.bf16 %v1135
        %v1180 = vunpack.c.l.bf16 %v1104
        %v1181 = vunpack.c.h.bf16 %v1135
        %v1182 = vunpack.c.h.bf16 %v1104
        %v1183 = vunpack.c.l.bf16 %v1139
        %v1184 = vunpack.c.l.bf16 %v1105
        %v1185 = vunpack.c.h.bf16 %v1139
        %v1186 = vunpack.c.h.bf16 %v1105
        %v1187 = vunpack.c.l.bf16 %v1143
        %v1188 = vunpack.c.l.bf16 %v1106
        %v1189 = vunpack.c.h.bf16 %v1143
        %v1190 = vunpack.c.h.bf16 %v1106
        %v1191 = vunpack.c.l.bf16 %v1147
        %v1192 = vunpack.c.l.bf16 %v1107
        %v1193 = vunpack.c.h.bf16 %v1147
        %v1194 = vunpack.c.h.bf16 %v1107
        %v1195 = vunpack.c.l.bf16 %v1158
        %v1196 = vunpack.c.l.bf16 %v1162
        %v1197 = vmul.f32 %v1163, %v1195
        %v1198 = vmul.f32 %v1164, %v1196
        %v1199 = vmul.f32 %v1165, %v1195
        %v1200 = vmul.f32 %v1166, %v1196
        %v1201 = vmul.f32 %v1167, %v1195
        %v1202 = vmul.f32 %v1168, %v1196
        %v1203 = vmul.f32 %v1169, %v1195
        %v1204 = vmul.f32 %v1170, %v1196
        %v1205 = vmul.f32 %v1171, %v1195
        %v1206 = vmul.f32 %v1172, %v1196
        %v1207 = vmul.f32 %v1173, %v1195
        %v1208 = vmul.f32 %v1174, %v1196
        %v1209 = vmul.f32 %v1175, %v1195
        %v1210 = vmul.f32 %v1176, %v1196
        %v1211 = vmul.f32 %v1177, %v1195
        %v1212 = vmul.f32 %v1178, %v1196
        %v1213 = vmul.f32 %v1179, %v1195
        %v1214 = vmul.f32 %v1180, %v1196
        %v1215 = vmul.f32 %v1181, %v1195
        %v1216 = vmul.f32 %v1182, %v1196
        %v1217 = vmul.f32 %v1183, %v1195
        %v1218 = vmul.f32 %v1184, %v1196
        %v1219 = vmul.f32 %v1185, %v1195
        %v1220 = vmul.f32 %v1186, %v1196
        %v1221 = vmul.f32 %v1187, %v1195
        %v1222 = vmul.f32 %v1188, %v1196
        %v1223 = vmul.f32 %v1189, %v1195
        %v1224 = vmul.f32 %v1190, %v1196
        %v1225 = vmul.f32 %v1191, %v1195
        %v1226 = vmul.f32 %v1192, %v1196
        %v1227 = vmul.f32 %v1193, %v1195
        %v1228 = vmul.f32 %v1194, %v1196
        %v1229 = vpack.c.bf16 %v1198, %v1197
        %v1230 = vpack.c.bf16 %v1200, %v1199
        %v1231 = vpack.c.bf16 %v1202, %v1201
        %v1232 = vpack.c.bf16 %v1204, %v1203
        %v1233 = vpack.c.bf16 %v1206, %v1205
        %v1234 = vpack.c.bf16 %v1208, %v1207
        %v1235 = vpack.c.bf16 %v1210, %v1209
        %v1236 = vpack.c.bf16 %v1212, %v1211
        %v1237 = vpack.c.bf16 %v1214, %v1213
        %v1238 = vpack.c.bf16 %v1216, %v1215
        %v1239 = vpack.c.bf16 %v1218, %v1217
        %v1240 = vpack.c.bf16 %v1220, %v1219
        %v1241 = vpack.c.bf16 %v1222, %v1221
        %v1242 = vpack.c.bf16 %v1224, %v1223
        %v1243 = vpack.c.bf16 %v1226, %v1225
        %v1244 = vpack.c.bf16 %v1228, %v1227
        %1245 = vrot.lane.b32.xlu0 %v685, 1
        %v1246 = vpop.permute.xlu0 %1245
        %1247 = vrot.lane.b32.xlu0 %v686, 1
        %v1248 = vpop.permute.xlu0 %1247
        %1249 = vrot.lane.b32.xlu0 %v687, 1
        %v1250 = vpop.permute.xlu0 %1249
        %1251 = vrot.lane.b32.xlu0 %v688, 1
        %v1252 = vpop.permute.xlu0 %1251
        %1253 = vrot.lane.b32.xlu0 %v689, 1
        %v1254 = vpop.permute.xlu0 %1253
        %1255 = vrot.lane.b32.xlu0 %v690, 1
        %v1256 = vpop.permute.xlu0 %1255
        %1257 = vrot.lane.b32.xlu0 %v691, 1
        %v1258 = vpop.permute.xlu0 %1257
        %1259 = vrot.lane.b32.xlu0 %v692, 1
        %v1260 = vpop.permute.xlu0 %1259
        %1261 = vrot.lane.b32.xlu0 %v725, 1
        %v1262 = vpop.permute.xlu0 %1261
        %1263 = vrot.lane.b32.xlu0 %v726, 1
        %v1264 = vpop.permute.xlu0 %1263
        %1265 = vrot.lane.b32.xlu0 %v727, 1
        %v1266 = vpop.permute.xlu0 %1265
        %1267 = vrot.lane.b32.xlu0 %v728, 1
        %v1268 = vpop.permute.xlu0 %1267
        %1269 = vrot.lane.b32.xlu0 %v729, 1
        %v1270 = vpop.permute.xlu0 %1269
        %1271 = vrot.lane.b32.xlu0 %v730, 1
        %v1272 = vpop.permute.xlu0 %1271
        %1273 = vrot.lane.b32.xlu0 %v731, 1
        %v1274 = vpop.permute.xlu0 %1273
        %1275 = vrot.lane.b32.xlu0 %v732, 1
        %v1276 = vpop.permute.xlu0 %1275
        %vm1277 = vcmask 7168
        %v1278 = vsel %vm1277, %v1262, %v1246
        %v1279 = vsel %vm1277, %v1264, %v1248
        %v1280 = vsel %vm1277, %v1266, %v1250
        %v1281 = vsel %vm1277, %v1268, %v1252
        %v1282 = vsel %vm1277, %v1270, %v1254
        %v1283 = vsel %vm1277, %v1272, %v1256
        %v1284 = vsel %vm1277, %v1274, %v1258
        %v1285 = vsel %vm1277, %v1276, %v1260
        %vm1294 = vcmask 7168
        %v1297 = vsel %vm1294, %v1246, %v1262
        %v1301 = vsel %vm1294, %v1248, %v1264
        %v1305 = vsel %vm1294, %v1250, %v1266
        %v1309 = vsel %vm1294, %v1252, %v1268
        %v1313 = vsel %vm1294, %v1254, %v1270
        %v1317 = vsel %vm1294, %v1256, %v1272
        %v1321 = vsel %vm1294, %v1258, %v1274
        %v1325 = vsel %vm1294, %v1260, %v1276
        %v1327 = vshrl.u32 %v1153, 16
        %v1328 = vpack.i.b16 %v1327, %v1327
        %v1330 = vperm.slane %v1328, 1
        %v1331 = vshrl.u32 %v1154, 16
        %v1332 = vpack.i.b16 %v1331, %v1331
        %v1334 = vperm.slane %v1332, 1
        %v1335 = vunpack.c.l.bf16 %v1297
        %v1336 = vunpack.c.l.bf16 %v1278
        %v1337 = vunpack.c.h.bf16 %v1297
        %v1338 = vunpack.c.h.bf16 %v1278
        %v1339 = vunpack.c.l.bf16 %v1301
        %v1340 = vunpack.c.l.bf16 %v1279
        %v1341 = vunpack.c.h.bf16 %v1301
        %v1342 = vunpack.c.h.bf16 %v1279
        %v1343 = vunpack.c.l.bf16 %v1305
        %v1344 = vunpack.c.l.bf16 %v1280
        %v1345 = vunpack.c.h.bf16 %v1305
        %v1346 = vunpack.c.h.bf16 %v1280
        %v1347 = vunpack.c.l.bf16 %v1309
        %v1348 = vunpack.c.l.bf16 %v1281
        %v1349 = vunpack.c.h.bf16 %v1309
        %v1350 = vunpack.c.h.bf16 %v1281
        %v1351 = vunpack.c.l.bf16 %v1313
        %v1352 = vunpack.c.l.bf16 %v1282
        %v1353 = vunpack.c.h.bf16 %v1313
        %v1354 = vunpack.c.h.bf16 %v1282
        %v1355 = vunpack.c.l.bf16 %v1317
        %v1356 = vunpack.c.l.bf16 %v1283
        %v1357 = vunpack.c.h.bf16 %v1317
        %v1358 = vunpack.c.h.bf16 %v1283
        %v1359 = vunpack.c.l.bf16 %v1321
        %v1360 = vunpack.c.l.bf16 %v1284
        %v1361 = vunpack.c.h.bf16 %v1321
        %v1362 = vunpack.c.h.bf16 %v1284
        %v1363 = vunpack.c.l.bf16 %v1325
        %v1364 = vunpack.c.l.bf16 %v1285
        %v1365 = vunpack.c.h.bf16 %v1325
        %v1366 = vunpack.c.h.bf16 %v1285
        %v1367 = vunpack.c.l.bf16 %v1330
        %v1368 = vunpack.c.l.bf16 %v1334
        %v1369 = vmul.f32 %v1335, %v1367
        %v1370 = vmul.f32 %v1336, %v1368
        %v1371 = vmul.f32 %v1337, %v1367
        %v1372 = vmul.f32 %v1338, %v1368
        %v1373 = vmul.f32 %v1339, %v1367
        %v1374 = vmul.f32 %v1340, %v1368
        %v1375 = vmul.f32 %v1341, %v1367
        %v1376 = vmul.f32 %v1342, %v1368
        %v1377 = vmul.f32 %v1343, %v1367
        %v1378 = vmul.f32 %v1344, %v1368
        %v1379 = vmul.f32 %v1345, %v1367
        %v1380 = vmul.f32 %v1346, %v1368
        %v1381 = vmul.f32 %v1347, %v1367
        %v1382 = vmul.f32 %v1348, %v1368
        %v1383 = vmul.f32 %v1349, %v1367
        %v1384 = vmul.f32 %v1350, %v1368
        %v1385 = vmul.f32 %v1351, %v1367
        %v1386 = vmul.f32 %v1352, %v1368
        %v1387 = vmul.f32 %v1353, %v1367
        %v1388 = vmul.f32 %v1354, %v1368
        %v1389 = vmul.f32 %v1355, %v1367
        %v1390 = vmul.f32 %v1356, %v1368
        %v1391 = vmul.f32 %v1357, %v1367
        %v1392 = vmul.f32 %v1358, %v1368
        %v1393 = vmul.f32 %v1359, %v1367
        %v1394 = vmul.f32 %v1360, %v1368
        %v1395 = vmul.f32 %v1361, %v1367
        %v1396 = vmul.f32 %v1362, %v1368
        %v1397 = vmul.f32 %v1363, %v1367
        %v1398 = vmul.f32 %v1364, %v1368
        %v1399 = vmul.f32 %v1365, %v1367
        %v1400 = vmul.f32 %v1366, %v1368
        %v1401 = vpack.c.bf16 %v1370, %v1369
        %v1402 = vpack.c.bf16 %v1372, %v1371
        %v1403 = vpack.c.bf16 %v1374, %v1373
        %v1404 = vpack.c.bf16 %v1376, %v1375
        %v1405 = vpack.c.bf16 %v1378, %v1377
        %v1406 = vpack.c.bf16 %v1380, %v1379
        %v1407 = vpack.c.bf16 %v1382, %v1381
        %v1408 = vpack.c.bf16 %v1384, %v1383
        %v1409 = vpack.c.bf16 %v1386, %v1385
        %v1410 = vpack.c.bf16 %v1388, %v1387
        %v1411 = vpack.c.bf16 %v1390, %v1389
        %v1412 = vpack.c.bf16 %v1392, %v1391
        %v1413 = vpack.c.bf16 %v1394, %v1393
        %v1414 = vpack.c.bf16 %v1396, %v1395
        %v1415 = vpack.c.bf16 %v1398, %v1397
        %v1416 = vpack.c.bf16 %v1400, %v1399
        %1417 = vrot.lane.b32.xlu0 %v725, 127
        %v1418 = vpop.permute.xlu0 %1417
        %1419 = vrot.lane.b32.xlu0 %v685, 127
        %v1420 = vpop.permute.xlu0 %1419
        %1421 = vrot.lane.b32.xlu0 %v726, 127
        %v1422 = vpop.permute.xlu0 %1421
        %1423 = vrot.lane.b32.xlu0 %v686, 127
        %v1424 = vpop.permute.xlu0 %1423
        %1425 = vrot.lane.b32.xlu0 %v727, 127
        %v1426 = vpop.permute.xlu0 %1425
        %1427 = vrot.lane.b32.xlu0 %v687, 127
        %v1428 = vpop.permute.xlu0 %1427
        %1429 = vrot.lane.b32.xlu0 %v728, 127
        %v1430 = vpop.permute.xlu0 %1429
        %1431 = vrot.lane.b32.xlu0 %v688, 127
        %v1432 = vpop.permute.xlu0 %1431
        %1433 = vrot.lane.b32.xlu0 %v729, 127
        %v1434 = vpop.permute.xlu0 %1433
        %1435 = vrot.lane.b32.xlu0 %v689, 127
        %v1436 = vpop.permute.xlu0 %1435
        %1437 = vrot.lane.b32.xlu0 %v730, 127
        %v1438 = vpop.permute.xlu0 %1437
        %1439 = vrot.lane.b32.xlu0 %v690, 127
        %v1440 = vpop.permute.xlu0 %1439
        %1441 = vrot.lane.b32.xlu0 %v731, 127
        %v1442 = vpop.permute.xlu0 %1441
        %1443 = vrot.lane.b32.xlu0 %v691, 127
        %v1444 = vpop.permute.xlu0 %1443
        %1445 = vrot.lane.b32.xlu0 %v732, 127
        %v1446 = vpop.permute.xlu0 %1445
        %1447 = vrot.lane.b32.xlu0 %v692, 127
        %v1448 = vpop.permute.xlu0 %1447
        %vm1449 = vcmask 1039360
        %v1450 = vsel %vm1449, %v1418, %v1420
        %v1451 = vsel %vm1449, %v1422, %v1424
        %v1452 = vsel %vm1449, %v1426, %v1428
        %v1453 = vsel %vm1449, %v1430, %v1432
        %v1454 = vsel %vm1449, %v1434, %v1436
        %v1455 = vsel %vm1449, %v1438, %v1440
        %v1456 = vsel %vm1449, %v1442, %v1444
        %v1457 = vsel %vm1449, %v1446, %v1448
        %vm1466 = vcmask 1039360
        %v1469 = vsel %vm1466, %v1420, %v1418
        %v1473 = vsel %vm1466, %v1424, %v1422
        %v1477 = vsel %vm1466, %v1428, %v1426
        %v1481 = vsel %vm1466, %v1432, %v1430
        %v1485 = vsel %vm1466, %v1436, %v1434
        %v1489 = vsel %vm1466, %v1440, %v1438
        %v1493 = vsel %vm1466, %v1444, %v1442
        %v1497 = vsel %vm1466, %v1448, %v1446
        %v1499 = vld [vmem:[%s2] sm:$0x44]
        %v1501 = vunpack.c.l.b16 %v1499
        %v1502 = vunpack.c.h.b16 %v1499
        %v1503 = vpack.c.b16 %v1501, %v1501
        %v1504 = vpack.c.b16 %v1502, %v1502
        %v1506 = vshrl.u32 %v1503, 16
        %v1507 = vpack.i.b16 %v1506, %v1506
        %v1509 = vperm.slane %v1507, 2
        %v1511 = vshrl.u32 %v1504, 16
        %v1512 = vpack.i.b16 %v1511, %v1511
        %v1514 = vperm.slane %v1512, 2
        %v1515 = vunpack.c.l.bf16 %v1450
        %v1516 = vunpack.c.l.bf16 %v1469
        %v1517 = vunpack.c.h.bf16 %v1450
        %v1518 = vunpack.c.h.bf16 %v1469
        %v1519 = vunpack.c.l.bf16 %v1451
        %v1520 = vunpack.c.l.bf16 %v1473
        %v1521 = vunpack.c.h.bf16 %v1451
        %v1522 = vunpack.c.h.bf16 %v1473
        %v1523 = vunpack.c.l.bf16 %v1452
        %v1524 = vunpack.c.l.bf16 %v1477
        %v1525 = vunpack.c.h.bf16 %v1452
        %v1526 = vunpack.c.h.bf16 %v1477
        %v1527 = vunpack.c.l.bf16 %v1453
        %v1528 = vunpack.c.l.bf16 %v1481
        %v1529 = vunpack.c.h.bf16 %v1453
        %v1530 = vunpack.c.h.bf16 %v1481
        %v1531 = vunpack.c.l.bf16 %v1454
        %v1532 = vunpack.c.l.bf16 %v1485
        %v1533 = vunpack.c.h.bf16 %v1454
        %v1534 = vunpack.c.h.bf16 %v1485
        %v1535 = vunpack.c.l.bf16 %v1455
        %v1536 = vunpack.c.l.bf16 %v1489
        %v1537 = vunpack.c.h.bf16 %v1455
        %v1538 = vunpack.c.h.bf16 %v1489
        %v1539 = vunpack.c.l.bf16 %v1456
        %v1540 = vunpack.c.l.bf16 %v1493
        %v1541 = vunpack.c.h.bf16 %v1456
        %v1542 = vunpack.c.h.bf16 %v1493
        %v1543 = vunpack.c.l.bf16 %v1457
        %v1544 = vunpack.c.l.bf16 %v1497
        %v1545 = vunpack.c.h.bf16 %v1457
        %v1546 = vunpack.c.h.bf16 %v1497
        %v1547 = vunpack.c.l.bf16 %v1509
        %v1548 = vunpack.c.l.bf16 %v1514
        %v1549 = vmul.f32 %v1515, %v1547
        %v1550 = vmul.f32 %v1516, %v1548
        %v1551 = vmul.f32 %v1517, %v1547
        %v1552 = vmul.f32 %v1518, %v1548
        %v1553 = vmul.f32 %v1519, %v1547
        %v1554 = vmul.f32 %v1520, %v1548
        %v1555 = vmul.f32 %v1521, %v1547
        %v1556 = vmul.f32 %v1522, %v1548
        %v1557 = vmul.f32 %v1523, %v1547
        %v1558 = vmul.f32 %v1524, %v1548
        %v1559 = vmul.f32 %v1525, %v1547
        %v1560 = vmul.f32 %v1526, %v1548
        %v1561 = vmul.f32 %v1527, %v1547
        %v1562 = vmul.f32 %v1528, %v1548
        %v1563 = vmul.f32 %v1529, %v1547
        %v1564 = vmul.f32 %v1530, %v1548
        %v1565 = vmul.f32 %v1531, %v1547
        %v1566 = vmul.f32 %v1532, %v1548
        %v1567 = vmul.f32 %v1533, %v1547
        %v1568 = vmul.f32 %v1534, %v1548
        %v1569 = vmul.f32 %v1535, %v1547
        %v1570 = vmul.f32 %v1536, %v1548
        %v1571 = vmul.f32 %v1537, %v1547
        %v1572 = vmul.f32 %v1538, %v1548
        %v1573 = vmul.f32 %v1539, %v1547
        %v1574 = vmul.f32 %v1540, %v1548
        %v1575 = vmul.f32 %v1541, %v1547
        %v1576 = vmul.f32 %v1542, %v1548
        %v1577 = vmul.f32 %v1543, %v1547
        %v1578 = vmul.f32 %v1544, %v1548
        %v1579 = vmul.f32 %v1545, %v1547
        %v1580 = vmul.f32 %v1546, %v1548
        %v1581 = vpack.c.bf16 %v1550, %v1549
        %v1582 = vpack.c.bf16 %v1552, %v1551
        %v1583 = vpack.c.bf16 %v1554, %v1553
        %v1584 = vpack.c.bf16 %v1556, %v1555
        %v1585 = vpack.c.bf16 %v1558, %v1557
        %v1586 = vpack.c.bf16 %v1560, %v1559
        %v1587 = vpack.c.bf16 %v1562, %v1561
        %v1588 = vpack.c.bf16 %v1564, %v1563
        %v1589 = vpack.c.bf16 %v1566, %v1565
        %v1590 = vpack.c.bf16 %v1568, %v1567
        %v1591 = vpack.c.bf16 %v1570, %v1569
        %v1592 = vpack.c.bf16 %v1572, %v1571
        %v1593 = vpack.c.bf16 %v1574, %v1573
        %v1594 = vpack.c.bf16 %v1576, %v1575
        %v1595 = vpack.c.bf16 %v1578, %v1577
        %v1596 = vpack.c.bf16 %v1580, %v1579
        %1597 = vrot.lane.b32.xlu0 %v725, 113
        %v1598 = vpop.permute.xlu0 %1597
        %1599 = vrot.lane.b32.xlu0 %v685, 113
        %v1600 = vpop.permute.xlu0 %1599
        %1601 = vrot.lane.b32.xlu0 %v726, 113
        %v1602 = vpop.permute.xlu0 %1601
        %1603 = vrot.lane.b32.xlu0 %v686, 113
        %v1604 = vpop.permute.xlu0 %1603
        %1605 = vrot.lane.b32.xlu0 %v727, 113
        %v1606 = vpop.permute.xlu0 %1605
        %1607 = vrot.lane.b32.xlu0 %v687, 113
        %v1608 = vpop.permute.xlu0 %1607
        %1609 = vrot.lane.b32.xlu0 %v728, 113
        %v1610 = vpop.permute.xlu0 %1609
        %1611 = vrot.lane.b32.xlu0 %v688, 113
        %v1612 = vpop.permute.xlu0 %1611
        %1613 = vrot.lane.b32.xlu0 %v729, 113
        %v1614 = vpop.permute.xlu0 %1613
        %1615 = vrot.lane.b32.xlu0 %v689, 113
        %v1616 = vpop.permute.xlu0 %1615
        %1617 = vrot.lane.b32.xlu0 %v730, 113
        %v1618 = vpop.permute.xlu0 %1617
        %1619 = vrot.lane.b32.xlu0 %v690, 113
        %v1620 = vpop.permute.xlu0 %1619
        %1621 = vrot.lane.b32.xlu0 %v731, 113
        %v1622 = vpop.permute.xlu0 %1621
        %1623 = vrot.lane.b32.xlu0 %v691, 113
        %v1624 = vpop.permute.xlu0 %1623
        %1625 = vrot.lane.b32.xlu0 %v732, 113
        %v1626 = vpop.permute.xlu0 %1625
        %1627 = vrot.lane.b32.xlu0 %v692, 113
        %v1628 = vpop.permute.xlu0 %1627
        %vm1629 = vcmask 924672
        %v1630 = vsel %vm1629, %v1598, %v1600
        %v1631 = vsel %vm1629, %v1602, %v1604
        %v1632 = vsel %vm1629, %v1606, %v1608
        %v1633 = vsel %vm1629, %v1610, %v1612
        %v1634 = vsel %vm1629, %v1614, %v1616
        %v1635 = vsel %vm1629, %v1618, %v1620
        %v1636 = vsel %vm1629, %v1622, %v1624
        %v1637 = vsel %vm1629, %v1626, %v1628
        %vm1646 = vcmask 924672
        %v1649 = vsel %vm1646, %v1600, %v1598
        %v1653 = vsel %vm1646, %v1604, %v1602
        %v1657 = vsel %vm1646, %v1608, %v1606
        %v1661 = vsel %vm1646, %v1612, %v1610
        %v1665 = vsel %vm1646, %v1616, %v1614
        %v1669 = vsel %vm1646, %v1620, %v1618
        %v1673 = vsel %vm1646, %v1624, %v1622
        %v1677 = vsel %vm1646, %v1628, %v1626
        %v1679 = vld [vmem:[%s2] sm:$0x88]
        %v1681 = vunpack.c.l.b16 %v1679
        %v1682 = vunpack.c.h.b16 %v1679
        %v1683 = vpack.c.b16 %v1681, %v1681
        %v1684 = vpack.c.b16 %v1682, %v1682
        %v1686 = vpack.i.b16 %v1683, %v1683
        %v1688 = vperm.slane %v1686, 3
        %v1690 = vpack.i.b16 %v1684, %v1684
        %v1692 = vperm.slane %v1690, 3
        %v1693 = vunpack.c.l.bf16 %v1630
        %v1694 = vunpack.c.l.bf16 %v1649
        %v1695 = vunpack.c.h.bf16 %v1630
        %v1696 = vunpack.c.h.bf16 %v1649
        %v1697 = vunpack.c.l.bf16 %v1631
        %v1698 = vunpack.c.l.bf16 %v1653
        %v1699 = vunpack.c.h.bf16 %v1631
        %v1700 = vunpack.c.h.bf16 %v1653
        %v1701 = vunpack.c.l.bf16 %v1632
        %v1702 = vunpack.c.l.bf16 %v1657
        %v1703 = vunpack.c.h.bf16 %v1632
        %v1704 = vunpack.c.h.bf16 %v1657
        %v1705 = vunpack.c.l.bf16 %v1633
        %v1706 = vunpack.c.l.bf16 %v1661
        %v1707 = vunpack.c.h.bf16 %v1633
        %v1708 = vunpack.c.h.bf16 %v1661
        %v1709 = vunpack.c.l.bf16 %v1634
        %v1710 = vunpack.c.l.bf16 %v1665
        %v1711 = vunpack.c.h.bf16 %v1634
        %v1712 = vunpack.c.h.bf16 %v1665
        %v1713 = vunpack.c.l.bf16 %v1635
        %v1714 = vunpack.c.l.bf16 %v1669
        %v1715 = vunpack.c.h.bf16 %v1635
        %v1716 = vunpack.c.h.bf16 %v1669
        %v1717 = vunpack.c.l.bf16 %v1636
        %v1718 = vunpack.c.l.bf16 %v1673
        %v1719 = vunpack.c.h.bf16 %v1636
        %v1720 = vunpack.c.h.bf16 %v1673
        %v1721 = vunpack.c.l.bf16 %v1637
        %v1722 = vunpack.c.l.bf16 %v1677
        %v1723 = vunpack.c.h.bf16 %v1637
        %v1724 = vunpack.c.h.bf16 %v1677
        %v1725 = vunpack.c.l.bf16 %v1688
        %v1726 = vunpack.c.l.bf16 %v1692
        %v1727 = vmul.f32 %v1693, %v1725
        %v1728 = vmul.f32 %v1694, %v1726
        %v1729 = vmul.f32 %v1695, %v1725
        %v1730 = vmul.f32 %v1696, %v1726
        %v1731 = vmul.f32 %v1697, %v1725
        %v1732 = vmul.f32 %v1698, %v1726
        %v1733 = vmul.f32 %v1699, %v1725
        %v1734 = vmul.f32 %v1700, %v1726
        %v1735 = vmul.f32 %v1701, %v1725
        %v1736 = vmul.f32 %v1702, %v1726
        %v1737 = vmul.f32 %v1703, %v1725
        %v1738 = vmul.f32 %v1704, %v1726
        %v1739 = vmul.f32 %v1705, %v1725
        %v1740 = vmul.f32 %v1706, %v1726
        %v1741 = vmul.f32 %v1707, %v1725
        %v1742 = vmul.f32 %v1708, %v1726
        %v1743 = vmul.f32 %v1709, %v1725
        %v1744 = vmul.f32 %v1710, %v1726
        %v1745 = vmul.f32 %v1711, %v1725
        %v1746 = vmul.f32 %v1712, %v1726
        %v1747 = vmul.f32 %v1713, %v1725
        %v1748 = vmul.f32 %v1714, %v1726
        %v1749 = vmul.f32 %v1715, %v1725
        %v1750 = vmul.f32 %v1716, %v1726
        %v1751 = vmul.f32 %v1717, %v1725
        %v1752 = vmul.f32 %v1718, %v1726
        %v1753 = vmul.f32 %v1719, %v1725
        %v1754 = vmul.f32 %v1720, %v1726
        %v1755 = vmul.f32 %v1721, %v1725
        %v1756 = vmul.f32 %v1722, %v1726
        %v1757 = vmul.f32 %v1723, %v1725
        %v1758 = vmul.f32 %v1724, %v1726
        %v1759 = vpack.c.bf16 %v1728, %v1727
        %v1760 = vpack.c.bf16 %v1730, %v1729
        %v1761 = vpack.c.bf16 %v1732, %v1731
        %v1762 = vpack.c.bf16 %v1734, %v1733
        %v1763 = vpack.c.bf16 %v1736, %v1735
        %v1764 = vpack.c.bf16 %v1738, %v1737
        %v1765 = vpack.c.bf16 %v1740, %v1739
        %v1766 = vpack.c.bf16 %v1742, %v1741
        %v1767 = vpack.c.bf16 %v1744, %v1743
        %v1768 = vpack.c.bf16 %v1746, %v1745
        %v1769 = vpack.c.bf16 %v1748, %v1747
        %v1770 = vpack.c.bf16 %v1750, %v1749
        %v1771 = vpack.c.bf16 %v1752, %v1751
        %v1772 = vpack.c.bf16 %v1754, %v1753
        %v1773 = vpack.c.bf16 %v1756, %v1755
        %v1774 = vpack.c.bf16 %v1758, %v1757
        %1775 = vrot.lane.b32.xlu0 %v725, 112
        %v1776 = vpop.permute.xlu0 %1775
        %1777 = vrot.lane.b32.xlu0 %v685, 112
        %v1778 = vpop.permute.xlu0 %1777
        %1779 = vrot.lane.b32.xlu0 %v726, 112
        %v1780 = vpop.permute.xlu0 %1779
        %1781 = vrot.lane.b32.xlu0 %v686, 112
        %v1782 = vpop.permute.xlu0 %1781
        %1783 = vrot.lane.b32.xlu0 %v727, 112
        %v1784 = vpop.permute.xlu0 %1783
        %1785 = vrot.lane.b32.xlu0 %v687, 112
        %v1786 = vpop.permute.xlu0 %1785
        %1787 = vrot.lane.b32.xlu0 %v728, 112
        %v1788 = vpop.permute.xlu0 %1787
        %1789 = vrot.lane.b32.xlu0 %v688, 112
        %v1790 = vpop.permute.xlu0 %1789
        %1791 = vrot.lane.b32.xlu0 %v729, 112
        %v1792 = vpop.permute.xlu0 %1791
        %1793 = vrot.lane.b32.xlu0 %v689, 112
        %v1794 = vpop.permute.xlu0 %1793
        %1795 = vrot.lane.b32.xlu0 %v730, 112
        %v1796 = vpop.permute.xlu0 %1795
        %1797 = vrot.lane.b32.xlu0 %v690, 112
        %v1798 = vpop.permute.xlu0 %1797
        %1799 = vrot.lane.b32.xlu0 %v731, 112
        %v1800 = vpop.permute.xlu0 %1799
        %1801 = vrot.lane.b32.xlu0 %v691, 112
        %v1802 = vpop.permute.xlu0 %1801
        %1803 = vrot.lane.b32.xlu0 %v732, 112
        %v1804 = vpop.permute.xlu0 %1803
        %1805 = vrot.lane.b32.xlu0 %v692, 112
        %v1806 = vpop.permute.xlu0 %1805
        %vm1807 = vcmask 916480
        %v1808 = vsel %vm1807, %v1776, %v1778
        %v1809 = vsel %vm1807, %v1780, %v1782
        %v1810 = vsel %vm1807, %v1784, %v1786
        %v1811 = vsel %vm1807, %v1788, %v1790
        %v1812 = vsel %vm1807, %v1792, %v1794
        %v1813 = vsel %vm1807, %v1796, %v1798
        %v1814 = vsel %vm1807, %v1800, %v1802
        %v1815 = vsel %vm1807, %v1804, %v1806
        %vm1824 = vcmask 916480
        %v1827 = vsel %vm1824, %v1778, %v1776
        %v1831 = vsel %vm1824, %v1782, %v1780
        %v1835 = vsel %vm1824, %v1786, %v1784
        %v1839 = vsel %vm1824, %v1790, %v1788
        %v1843 = vsel %vm1824, %v1794, %v1792
        %v1847 = vsel %vm1824, %v1798, %v1796
        %v1851 = vsel %vm1824, %v1802, %v1800
        %v1855 = vsel %vm1824, %v1806, %v1804
        %v1857 = vshrl.u32 %v1683, 16
        %v1858 = vpack.i.b16 %v1857, %v1857
        %v1860 = vperm.slane %v1858, 3
        %v1861 = vshrl.u32 %v1684, 16
        %v1862 = vpack.i.b16 %v1861, %v1861
        %v1864 = vperm.slane %v1862, 3
        %v1865 = vunpack.c.l.bf16 %v1808
        %v1866 = vunpack.c.l.bf16 %v1827
        %v1867 = vunpack.c.h.bf16 %v1808
        %v1868 = vunpack.c.h.bf16 %v1827
        %v1869 = vunpack.c.l.bf16 %v1809
        %v1870 = vunpack.c.l.bf16 %v1831
        %v1871 = vunpack.c.h.bf16 %v1809
        %v1872 = vunpack.c.h.bf16 %v1831
        %v1873 = vunpack.c.l.bf16 %v1810
        %v1874 = vunpack.c.l.bf16 %v1835
        %v1875 = vunpack.c.h.bf16 %v1810
        %v1876 = vunpack.c.h.bf16 %v1835
        %v1877 = vunpack.c.l.bf16 %v1811
        %v1878 = vunpack.c.l.bf16 %v1839
        %v1879 = vunpack.c.h.bf16 %v1811
        %v1880 = vunpack.c.h.bf16 %v1839
        %v1881 = vunpack.c.l.bf16 %v1812
        %v1882 = vunpack.c.l.bf16 %v1843
        %v1883 = vunpack.c.h.bf16 %v1812
        %v1884 = vunpack.c.h.bf16 %v1843
        %v1885 = vunpack.c.l.bf16 %v1813
        %v1886 = vunpack.c.l.bf16 %v1847
        %v1887 = vunpack.c.h.bf16 %v1813
        %v1888 = vunpack.c.h.bf16 %v1847
        %v1889 = vunpack.c.l.bf16 %v1814
        %v1890 = vunpack.c.l.bf16 %v1851
        %v1891 = vunpack.c.h.bf16 %v1814
        %v1892 = vunpack.c.h.bf16 %v1851
        %v1893 = vunpack.c.l.bf16 %v1815
        %v1894 = vunpack.c.l.bf16 %v1855
        %v1895 = vunpack.c.h.bf16 %v1815
        %v1896 = vunpack.c.h.bf16 %v1855
        %v1897 = vunpack.c.l.bf16 %v1860
        %v1898 = vunpack.c.l.bf16 %v1864
        %v1899 = vmul.f32 %v1865, %v1897
        %v1900 = vmul.f32 %v1866, %v1898
        %v1901 = vmul.f32 %v1867, %v1897
        %v1902 = vmul.f32 %v1868, %v1898
        %v1903 = vmul.f32 %v1869, %v1897
        %v1904 = vmul.f32 %v1870, %v1898
        %v1905 = vmul.f32 %v1871, %v1897
        %v1906 = vmul.f32 %v1872, %v1898
        %v1907 = vmul.f32 %v1873, %v1897
        %v1908 = vmul.f32 %v1874, %v1898
        %v1909 = vmul.f32 %v1875, %v1897
        %v1910 = vmul.f32 %v1876, %v1898
        %v1911 = vmul.f32 %v1877, %v1897
        %v1912 = vmul.f32 %v1878, %v1898
        %v1913 = vmul.f32 %v1879, %v1897
        %v1914 = vmul.f32 %v1880, %v1898
        %v1915 = vmul.f32 %v1881, %v1897
        %v1916 = vmul.f32 %v1882, %v1898
        %v1917 = vmul.f32 %v1883, %v1897
        %v1918 = vmul.f32 %v1884, %v1898
        %v1919 = vmul.f32 %v1885, %v1897
        %v1920 = vmul.f32 %v1886, %v1898
        %v1921 = vmul.f32 %v1887, %v1897
        %v1922 = vmul.f32 %v1888, %v1898
        %v1923 = vmul.f32 %v1889, %v1897
        %v1924 = vmul.f32 %v1890, %v1898
        %v1925 = vmul.f32 %v1891, %v1897
        %v1926 = vmul.f32 %v1892, %v1898
        %v1927 = vmul.f32 %v1893, %v1897
        %v1928 = vmul.f32 %v1894, %v1898
        %v1929 = vmul.f32 %v1895, %v1897
        %v1930 = vmul.f32 %v1896, %v1898
        %v1931 = vpack.c.bf16 %v1900, %v1899
        %v1932 = vpack.c.bf16 %v1902, %v1901
        %v1933 = vpack.c.bf16 %v1904, %v1903
        %v1934 = vpack.c.bf16 %v1906, %v1905
        %v1935 = vpack.c.bf16 %v1908, %v1907
        %v1936 = vpack.c.bf16 %v1910, %v1909
        %v1937 = vpack.c.bf16 %v1912, %v1911
        %v1938 = vpack.c.bf16 %v1914, %v1913
        %v1939 = vpack.c.bf16 %v1916, %v1915
        %v1940 = vpack.c.bf16 %v1918, %v1917
        %v1941 = vpack.c.bf16 %v1920, %v1919
        %v1942 = vpack.c.bf16 %v1922, %v1921
        %v1943 = vpack.c.bf16 %v1924, %v1923
        %v1944 = vpack.c.bf16 %v1926, %v1925
        %v1945 = vpack.c.bf16 %v1928, %v1927
        %v1946 = vpack.c.bf16 %v1930, %v1929
        %1947 = vrot.lane.b32.xlu0 %v725, 111
        %v1948 = vpop.permute.xlu0 %1947
        %1949 = vrot.lane.b32.xlu0 %v685, 111
        %v1950 = vpop.permute.xlu0 %1949
        %1951 = vrot.lane.b32.xlu0 %v726, 111
        %v1952 = vpop.permute.xlu0 %1951
        %1953 = vrot.lane.b32.xlu0 %v686, 111
        %v1954 = vpop.permute.xlu0 %1953
        %1955 = vrot.lane.b32.xlu0 %v727, 111
        %v1956 = vpop.permute.xlu0 %1955
        %1957 = vrot.lane.b32.xlu0 %v687, 111
        %v1958 = vpop.permute.xlu0 %1957
        %1959 = vrot.lane.b32.xlu0 %v728, 111
        %v1960 = vpop.permute.xlu0 %1959
        %1961 = vrot.lane.b32.xlu0 %v688, 111
        %v1962 = vpop.permute.xlu0 %1961
        %1963 = vrot.lane.b32.xlu0 %v729, 111
        %v1964 = vpop.permute.xlu0 %1963
        %1965 = vrot.lane.b32.xlu0 %v689, 111
        %v1966 = vpop.permute.xlu0 %1965
        %1967 = vrot.lane.b32.xlu0 %v730, 111
        %v1968 = vpop.permute.xlu0 %1967
        %1969 = vrot.lane.b32.xlu0 %v690, 111
        %v1970 = vpop.permute.xlu0 %1969
        %1971 = vrot.lane.b32.xlu0 %v731, 111
        %v1972 = vpop.permute.xlu0 %1971
        %1973 = vrot.lane.b32.xlu0 %v691, 111
        %v1974 = vpop.permute.xlu0 %1973
        %1975 = vrot.lane.b32.xlu0 %v732, 111
        %v1976 = vpop.permute.xlu0 %1975
        %1977 = vrot.lane.b32.xlu0 %v692, 111
        %v1978 = vpop.permute.xlu0 %1977
        %vm1979 = vcmask 908288
        %v1980 = vsel %vm1979, %v1948, %v1950
        %v1981 = vsel %vm1979, %v1952, %v1954
        %v1982 = vsel %vm1979, %v1956, %v1958
        %v1983 = vsel %vm1979, %v1960, %v1962
        %v1984 = vsel %vm1979, %v1964, %v1966
        %v1985 = vsel %vm1979, %v1968, %v1970
        %v1986 = vsel %vm1979, %v1972, %v1974
        %v1987 = vsel %vm1979, %v1976, %v1978
        %vm1996 = vcmask 908288
        %v1999 = vsel %vm1996, %v1950, %v1948
        %v2003 = vsel %vm1996, %v1954, %v1952
        %v2007 = vsel %vm1996, %v1958, %v1956
        %v2011 = vsel %vm1996, %v1962, %v1960
        %v2015 = vsel %vm1996, %v1966, %v1964
        %v2019 = vsel %vm1996, %v1970, %v1968
        %v2023 = vsel %vm1996, %v1974, %v1972
        %v2027 = vsel %vm1996, %v1978, %v1976
        %v2029 = vld [vmem:[%s2 + $0x8] sm:$0x11]
        %v2031 = vunpack.c.l.b16 %v2029
        %v2032 = vunpack.c.h.b16 %v2029
        %v2033 = vpack.c.b16 %v2031, %v2031
        %v2034 = vpack.c.b16 %v2032, %v2032
        %v2036 = vpack.i.b16 %v2033, %v2033
        %v2038 = vperm.slane %v2036, 0
        %v2040 = vpack.i.b16 %v2034, %v2034
        %v2042 = vperm.slane %v2040, 0
        %v2043 = vunpack.c.l.bf16 %v1980
        %v2044 = vunpack.c.l.bf16 %v1999
        %v2045 = vunpack.c.h.bf16 %v1980
        %v2046 = vunpack.c.h.bf16 %v1999
        %v2047 = vunpack.c.l.bf16 %v1981
        %v2048 = vunpack.c.l.bf16 %v2003
        %v2049 = vunpack.c.h.bf16 %v1981
        %v2050 = vunpack.c.h.bf16 %v2003
        %v2051 = vunpack.c.l.bf16 %v1982
        %v2052 = vunpack.c.l.bf16 %v2007
        %v2053 = vunpack.c.h.bf16 %v1982
        %v2054 = vunpack.c.h.bf16 %v2007
        %v2055 = vunpack.c.l.bf16 %v1983
        %v2056 = vunpack.c.l.bf16 %v2011
        %v2057 = vunpack.c.h.bf16 %v1983
        %v2058 = vunpack.c.h.bf16 %v2011
        %v2059 = vunpack.c.l.bf16 %v1984
        %v2060 = vunpack.c.l.bf16 %v2015
        %v2061 = vunpack.c.h.bf16 %v1984
        %v2062 = vunpack.c.h.bf16 %v2015
        %v2063 = vunpack.c.l.bf16 %v1985
        %v2064 = vunpack.c.l.bf16 %v2019
        %v2065 = vunpack.c.h.bf16 %v1985
        %v2066 = vunpack.c.h.bf16 %v2019
        %v2067 = vunpack.c.l.bf16 %v1986
        %v2068 = vunpack.c.l.bf16 %v2023
        %v2069 = vunpack.c.h.bf16 %v1986
        %v2070 = vunpack.c.h.bf16 %v2023
        %v2071 = vunpack.c.l.bf16 %v1987
        %v2072 = vunpack.c.l.bf16 %v2027
        %v2073 = vunpack.c.h.bf16 %v1987
        %v2074 = vunpack.c.h.bf16 %v2027
        %v2075 = vunpack.c.l.bf16 %v2038
        %v2076 = vunpack.c.l.bf16 %v2042
        %v2077 = vmul.f32 %v2043, %v2075
        %v2078 = vmul.f32 %v2044, %v2076
        %v2079 = vmul.f32 %v2045, %v2075
        %v2080 = vmul.f32 %v2046, %v2076
        %v2081 = vmul.f32 %v2047, %v2075
        %v2082 = vmul.f32 %v2048, %v2076
        %v2083 = vmul.f32 %v2049, %v2075
        %v2084 = vmul.f32 %v2050, %v2076
        %v2085 = vmul.f32 %v2051, %v2075
        %v2086 = vmul.f32 %v2052, %v2076
        %v2087 = vmul.f32 %v2053, %v2075
        %v2088 = vmul.f32 %v2054, %v2076
        %v2089 = vmul.f32 %v2055, %v2075
        %v2090 = vmul.f32 %v2056, %v2076
        %v2091 = vmul.f32 %v2057, %v2075
        %v2092 = vmul.f32 %v2058, %v2076
        %v2093 = vmul.f32 %v2059, %v2075
        %v2094 = vmul.f32 %v2060, %v2076
        %v2095 = vmul.f32 %v2061, %v2075
        %v2096 = vmul.f32 %v2062, %v2076
        %v2097 = vmul.f32 %v2063, %v2075
        %v2098 = vmul.f32 %v2064, %v2076
        %v2099 = vmul.f32 %v2065, %v2075
        %v2100 = vmul.f32 %v2066, %v2076
        %v2101 = vmul.f32 %v2067, %v2075
        %v2102 = vmul.f32 %v2068, %v2076
        %v2103 = vmul.f32 %v2069, %v2075
        %v2104 = vmul.f32 %v2070, %v2076
        %v2105 = vmul.f32 %v2071, %v2075
        %v2106 = vmul.f32 %v2072, %v2076
        %v2107 = vmul.f32 %v2073, %v2075
        %v2108 = vmul.f32 %v2074, %v2076
        %v2109 = vpack.c.bf16 %v2078, %v2077
        %v2110 = vpack.c.bf16 %v2080, %v2079
        %v2111 = vpack.c.bf16 %v2082, %v2081
        %v2112 = vpack.c.bf16 %v2084, %v2083
        %v2113 = vpack.c.bf16 %v2086, %v2085
        %v2114 = vpack.c.bf16 %v2088, %v2087
        %v2115 = vpack.c.bf16 %v2090, %v2089
        %v2116 = vpack.c.bf16 %v2092, %v2091
        %v2117 = vpack.c.bf16 %v2094, %v2093
        %v2118 = vpack.c.bf16 %v2096, %v2095
        %v2119 = vpack.c.bf16 %v2098, %v2097
        %v2120 = vpack.c.bf16 %v2100, %v2099
        %v2121 = vpack.c.bf16 %v2102, %v2101
        %v2122 = vpack.c.bf16 %v2104, %v2103
        %v2123 = vpack.c.bf16 %v2106, %v2105
        %v2124 = vpack.c.bf16 %v2108, %v2107
        %v2141 = vunpack.c.l.b16 %v879
        %v2142 = vunpack.c.h.b16 %v879
        %v2143 = vunpack.c.l.b16 %v880
        %v2144 = vunpack.c.h.b16 %v880
        %v2145 = vunpack.c.l.b16 %v881
        %v2146 = vunpack.c.h.b16 %v881
        %v2147 = vunpack.c.l.b16 %v882
        %v2148 = vunpack.c.h.b16 %v882
        %v2149 = vunpack.c.l.b16 %v883
        %v2150 = vunpack.c.h.b16 %v883
        %v2151 = vunpack.c.l.b16 %v884
        %v2152 = vunpack.c.h.b16 %v884
        %v2153 = vunpack.c.l.b16 %v885
        %v2154 = vunpack.c.h.b16 %v885
        %v2155 = vunpack.c.l.b16 %v886
        %v2156 = vunpack.c.h.b16 %v886
        %v2157 = vunpack.c.l.b16 %v887
        %v2158 = vunpack.c.h.b16 %v887
        %v2159 = vunpack.c.l.b16 %v888
        %v2160 = vunpack.c.h.b16 %v888
        %v2161 = vunpack.c.l.b16 %v889
        %v2162 = vunpack.c.h.b16 %v889
        %v2163 = vunpack.c.l.b16 %v890
        %v2164 = vunpack.c.h.b16 %v890
        %v2165 = vunpack.c.l.b16 %v891
        %v2166 = vunpack.c.h.b16 %v891
        %v2167 = vunpack.c.l.b16 %v892
        %v2168 = vunpack.c.h.b16 %v892
        %v2169 = vunpack.c.l.b16 %v893
        %v2170 = vunpack.c.h.b16 %v893
        %v2171 = vunpack.c.l.b16 %v894
        %v2172 = vunpack.c.h.b16 %v894
        %v2173 = vpack.c.b16 %v2143, %v2141
        %v2174 = vpack.c.b16 %v2144, %v2142
        %v2175 = vpack.c.b16 %v2147, %v2145
        %v2176 = vpack.c.b16 %v2148, %v2146
        %v2177 = vpack.c.b16 %v2151, %v2149
        %v2178 = vpack.c.b16 %v2152, %v2150
        %v2179 = vpack.c.b16 %v2155, %v2153
        %v2180 = vpack.c.b16 %v2156, %v2154
        %v2181 = vpack.c.b16 %v2159, %v2157
        %v2182 = vpack.c.b16 %v2160, %v2158
        %v2183 = vpack.c.b16 %v2163, %v2161
        %v2184 = vpack.c.b16 %v2164, %v2162
        %v2185 = vpack.c.b16 %v2167, %v2165
        %v2186 = vpack.c.b16 %v2168, %v2166
        %v2187 = vpack.c.b16 %v2171, %v2169
        %v2188 = vpack.c.b16 %v2172, %v2170
        %v2221 = vunpack.c.l.b16 %v1051
        %v2222 = vunpack.c.h.b16 %v1051
        %v2223 = vunpack.c.l.b16 %v1052
        %v2224 = vunpack.c.h.b16 %v1052
        %v2225 = vunpack.c.l.b16 %v1053
        %v2226 = vunpack.c.h.b16 %v1053
        %v2227 = vunpack.c.l.b16 %v1054
        %v2228 = vunpack.c.h.b16 %v1054
        %v2229 = vunpack.c.l.b16 %v1055
        %v2230 = vunpack.c.h.b16 %v1055
        %v2231 = vunpack.c.l.b16 %v1056
        %v2232 = vunpack.c.h.b16 %v1056
        %v2233 = vunpack.c.l.b16 %v1057
        %v2234 = vunpack.c.h.b16 %v1057
        %v2235 = vunpack.c.l.b16 %v1058
        %v2236 = vunpack.c.h.b16 %v1058
        %v2237 = vunpack.c.l.b16 %v1059
        %v2238 = vunpack.c.h.b16 %v1059
        %v2239 = vunpack.c.l.b16 %v1060
        %v2240 = vunpack.c.h.b16 %v1060
        %v2241 = vunpack.c.l.b16 %v1061
        %v2242 = vunpack.c.h.b16 %v1061
        %v2243 = vunpack.c.l.b16 %v1062
        %v2244 = vunpack.c.h.b16 %v1062
        %v2245 = vunpack.c.l.b16 %v1063
        %v2246 = vunpack.c.h.b16 %v1063
        %v2247 = vunpack.c.l.b16 %v1064
        %v2248 = vunpack.c.h.b16 %v1064
        %v2249 = vunpack.c.l.b16 %v1065
        %v2250 = vunpack.c.h.b16 %v1065
        %v2251 = vunpack.c.l.b16 %v1066
        %v2252 = vunpack.c.h.b16 %v1066
        %v2253 = vpack.c.b16 %v2223, %v2221
        %v2254 = vpack.c.b16 %v2224, %v2222
        %v2255 = vpack.c.b16 %v2227, %v2225
        %v2256 = vpack.c.b16 %v2228, %v2226
        %v2257 = vpack.c.b16 %v2231, %v2229
        %v2258 = vpack.c.b16 %v2232, %v2230
        %v2259 = vpack.c.b16 %v2235, %v2233
        %v2260 = vpack.c.b16 %v2236, %v2234
        %v2261 = vpack.c.b16 %v2239, %v2237
        %v2262 = vpack.c.b16 %v2240, %v2238
        %v2263 = vpack.c.b16 %v2243, %v2241
        %v2264 = vpack.c.b16 %v2244, %v2242
        %v2265 = vpack.c.b16 %v2247, %v2245
        %v2266 = vpack.c.b16 %v2248, %v2246
        %v2267 = vpack.c.b16 %v2251, %v2249
        %v2268 = vpack.c.b16 %v2252, %v2250
        %v2301 = vunpack.c.l.b16 %v1229
        %v2302 = vunpack.c.h.b16 %v1229
        %v2303 = vunpack.c.l.b16 %v1230
        %v2304 = vunpack.c.h.b16 %v1230
        %v2305 = vunpack.c.l.b16 %v1231
        %v2306 = vunpack.c.h.b16 %v1231
        %v2307 = vunpack.c.l.b16 %v1232
        %v2308 = vunpack.c.h.b16 %v1232
        %v2309 = vunpack.c.l.b16 %v1233
        %v2310 = vunpack.c.h.b16 %v1233
        %v2311 = vunpack.c.l.b16 %v1234
        %v2312 = vunpack.c.h.b16 %v1234
        %v2313 = vunpack.c.l.b16 %v1235
        %v2314 = vunpack.c.h.b16 %v1235
        %v2315 = vunpack.c.l.b16 %v1236
        %v2316 = vunpack.c.h.b16 %v1236
        %v2317 = vunpack.c.l.b16 %v1237
        %v2318 = vunpack.c.h.b16 %v1237
        %v2319 = vunpack.c.l.b16 %v1238
        %v2320 = vunpack.c.h.b16 %v1238
        %v2321 = vunpack.c.l.b16 %v1239
        %v2322 = vunpack.c.h.b16 %v1239
        %v2323 = vunpack.c.l.b16 %v1240
        %v2324 = vunpack.c.h.b16 %v1240
        %v2325 = vunpack.c.l.b16 %v1241
        %v2326 = vunpack.c.h.b16 %v1241
        %v2327 = vunpack.c.l.b16 %v1242
        %v2328 = vunpack.c.h.b16 %v1242
        %v2329 = vunpack.c.l.b16 %v1243
        %v2330 = vunpack.c.h.b16 %v1243
        %v2331 = vunpack.c.l.b16 %v1244
        %v2332 = vunpack.c.h.b16 %v1244
        %v2333 = vpack.c.b16 %v2303, %v2301
        %v2334 = vpack.c.b16 %v2304, %v2302
        %v2335 = vpack.c.b16 %v2307, %v2305
        %v2336 = vpack.c.b16 %v2308, %v2306
        %v2337 = vpack.c.b16 %v2311, %v2309
        %v2338 = vpack.c.b16 %v2312, %v2310
        %v2339 = vpack.c.b16 %v2315, %v2313
        %v2340 = vpack.c.b16 %v2316, %v2314
        %v2341 = vpack.c.b16 %v2319, %v2317
        %v2342 = vpack.c.b16 %v2320, %v2318
        %v2343 = vpack.c.b16 %v2323, %v2321
        %v2344 = vpack.c.b16 %v2324, %v2322
        %v2345 = vpack.c.b16 %v2327, %v2325
        %v2346 = vpack.c.b16 %v2328, %v2326
        %v2347 = vpack.c.b16 %v2331, %v2329
        %v2348 = vpack.c.b16 %v2332, %v2330
        %v2381 = vunpack.c.l.b16 %v1401
        %v2382 = vunpack.c.h.b16 %v1401
        %v2383 = vunpack.c.l.b16 %v1402
        %v2384 = vunpack.c.h.b16 %v1402
        %v2385 = vunpack.c.l.b16 %v1403
        %v2386 = vunpack.c.h.b16 %v1403
        %v2387 = vunpack.c.l.b16 %v1404
        %v2388 = vunpack.c.h.b16 %v1404
        %v2389 = vunpack.c.l.b16 %v1405
        %v2390 = vunpack.c.h.b16 %v1405
        %v2391 = vunpack.c.l.b16 %v1406
        %v2392 = vunpack.c.h.b16 %v1406
        %v2393 = vunpack.c.l.b16 %v1407
        %v2394 = vunpack.c.h.b16 %v1407
        %v2395 = vunpack.c.l.b16 %v1408
        %v2396 = vunpack.c.h.b16 %v1408
        %v2397 = vunpack.c.l.b16 %v1409
        %v2398 = vunpack.c.h.b16 %v1409
        %v2399 = vunpack.c.l.b16 %v1410
        %v2400 = vunpack.c.h.b16 %v1410
        %v2401 = vunpack.c.l.b16 %v1411
        %v2402 = vunpack.c.h.b16 %v1411
        %v2403 = vunpack.c.l.b16 %v1412
        %v2404 = vunpack.c.h.b16 %v1412
        %v2405 = vunpack.c.l.b16 %v1413
        %v2406 = vunpack.c.h.b16 %v1413
        %v2407 = vunpack.c.l.b16 %v1414
        %v2408 = vunpack.c.h.b16 %v1414
        %v2409 = vunpack.c.l.b16 %v1415
        %v2410 = vunpack.c.h.b16 %v1415
        %v2411 = vunpack.c.l.b16 %v1416
        %v2412 = vunpack.c.h.b16 %v1416
        %v2413 = vpack.c.b16 %v2383, %v2381
        %v2414 = vpack.c.b16 %v2384, %v2382
        %v2415 = vpack.c.b16 %v2387, %v2385
        %v2416 = vpack.c.b16 %v2388, %v2386
        %v2417 = vpack.c.b16 %v2391, %v2389
        %v2418 = vpack.c.b16 %v2392, %v2390
        %v2419 = vpack.c.b16 %v2395, %v2393
        %v2420 = vpack.c.b16 %v2396, %v2394
        %v2421 = vpack.c.b16 %v2399, %v2397
        %v2422 = vpack.c.b16 %v2400, %v2398
        %v2423 = vpack.c.b16 %v2403, %v2401
        %v2424 = vpack.c.b16 %v2404, %v2402
        %v2425 = vpack.c.b16 %v2407, %v2405
        %v2426 = vpack.c.b16 %v2408, %v2406
        %v2427 = vpack.c.b16 %v2411, %v2409
        %v2428 = vpack.c.b16 %v2412, %v2410
        %v2477 = vunpack.c.l.b16 %v1581
        %v2478 = vunpack.c.h.b16 %v1581
        %v2479 = vunpack.c.l.b16 %v1582
        %v2480 = vunpack.c.h.b16 %v1582
        %v2481 = vunpack.c.l.b16 %v1583
        %v2482 = vunpack.c.h.b16 %v1583
        %v2483 = vunpack.c.l.b16 %v1584
        %v2484 = vunpack.c.h.b16 %v1584
        %v2485 = vunpack.c.l.b16 %v1585
        %v2486 = vunpack.c.h.b16 %v1585
        %v2487 = vunpack.c.l.b16 %v1586
        %v2488 = vunpack.c.h.b16 %v1586
        %v2489 = vunpack.c.l.b16 %v1587
        %v2490 = vunpack.c.h.b16 %v1587
        %v2491 = vunpack.c.l.b16 %v1588
        %v2492 = vunpack.c.h.b16 %v1588
        %v2493 = vunpack.c.l.b16 %v1589
        %v2494 = vunpack.c.h.b16 %v1589
        %v2495 = vunpack.c.l.b16 %v1590
        %v2496 = vunpack.c.h.b16 %v1590
        %v2497 = vunpack.c.l.b16 %v1591
        %v2498 = vunpack.c.h.b16 %v1591
        %v2499 = vunpack.c.l.b16 %v1592
        %v2500 = vunpack.c.h.b16 %v1592
        %v2501 = vunpack.c.l.b16 %v1593
        %v2502 = vunpack.c.h.b16 %v1593
        %v2503 = vunpack.c.l.b16 %v1594
        %v2504 = vunpack.c.h.b16 %v1594
        %v2505 = vunpack.c.l.b16 %v1595
        %v2506 = vunpack.c.h.b16 %v1595
        %v2507 = vunpack.c.l.b16 %v1596
        %v2508 = vunpack.c.h.b16 %v1596
        %v2509 = vpack.c.b16 %v2479, %v2477
        %v2510 = vpack.c.b16 %v2480, %v2478
        %v2511 = vpack.c.b16 %v2483, %v2481
        %v2512 = vpack.c.b16 %v2484, %v2482
        %v2513 = vpack.c.b16 %v2487, %v2485
        %v2514 = vpack.c.b16 %v2488, %v2486
        %v2515 = vpack.c.b16 %v2491, %v2489
        %v2516 = vpack.c.b16 %v2492, %v2490
        %v2517 = vpack.c.b16 %v2495, %v2493
        %v2518 = vpack.c.b16 %v2496, %v2494
        %v2519 = vpack.c.b16 %v2499, %v2497
        %v2520 = vpack.c.b16 %v2500, %v2498
        %v2521 = vpack.c.b16 %v2503, %v2501
        %v2522 = vpack.c.b16 %v2504, %v2502
        %v2523 = vpack.c.b16 %v2507, %v2505
        %v2524 = vpack.c.b16 %v2508, %v2506
        %v2557 = vunpack.c.l.b16 %v1759
        %v2558 = vunpack.c.h.b16 %v1759
        %v2559 = vunpack.c.l.b16 %v1760
        %v2560 = vunpack.c.h.b16 %v1760
        %v2561 = vunpack.c.l.b16 %v1761
        %v2562 = vunpack.c.h.b16 %v1761
        %v2563 = vunpack.c.l.b16 %v1762
        %v2564 = vunpack.c.h.b16 %v1762
        %v2565 = vunpack.c.l.b16 %v1763
        %v2566 = vunpack.c.h.b16 %v1763
        %v2567 = vunpack.c.l.b16 %v1764
        %v2568 = vunpack.c.h.b16 %v1764
        %v2569 = vunpack.c.l.b16 %v1765
        %v2570 = vunpack.c.h.b16 %v1765
        %v2571 = vunpack.c.l.b16 %v1766
        %v2572 = vunpack.c.h.b16 %v1766
        %v2573 = vunpack.c.l.b16 %v1767
        %v2574 = vunpack.c.h.b16 %v1767
        %v2575 = vunpack.c.l.b16 %v1768
        %v2576 = vunpack.c.h.b16 %v1768
        %v2577 = vunpack.c.l.b16 %v1769
        %v2578 = vunpack.c.h.b16 %v1769
        %v2579 = vunpack.c.l.b16 %v1770
        %v2580 = vunpack.c.h.b16 %v1770
        %v2581 = vunpack.c.l.b16 %v1771
        %v2582 = vunpack.c.h.b16 %v1771
        %v2583 = vunpack.c.l.b16 %v1772
        %v2584 = vunpack.c.h.b16 %v1772
        %v2585 = vunpack.c.l.b16 %v1773
        %v2586 = vunpack.c.h.b16 %v1773
        %v2587 = vunpack.c.l.b16 %v1774
        %v2588 = vunpack.c.h.b16 %v1774
        %v2589 = vpack.c.b16 %v2559, %v2557
        %v2590 = vpack.c.b16 %v2560, %v2558
        %v2591 = vpack.c.b16 %v2563, %v2561
        %v2592 = vpack.c.b16 %v2564, %v2562
        %v2593 = vpack.c.b16 %v2567, %v2565
        %v2594 = vpack.c.b16 %v2568, %v2566
        %v2595 = vpack.c.b16 %v2571, %v2569
        %v2596 = vpack.c.b16 %v2572, %v2570
        %v2597 = vpack.c.b16 %v2575, %v2573
        %v2598 = vpack.c.b16 %v2576, %v2574
        %v2599 = vpack.c.b16 %v2579, %v2577
        %v2600 = vpack.c.b16 %v2580, %v2578
        %v2601 = vpack.c.b16 %v2583, %v2581
        %v2602 = vpack.c.b16 %v2584, %v2582
        %v2603 = vpack.c.b16 %v2587, %v2585
        %v2604 = vpack.c.b16 %v2588, %v2586
        %v2637 = vunpack.c.l.b16 %v1931
        %v2638 = vunpack.c.h.b16 %v1931
        %v2639 = vunpack.c.l.b16 %v1932
        %v2640 = vunpack.c.h.b16 %v1932
        %v2641 = vunpack.c.l.b16 %v1933
        %v2642 = vunpack.c.h.b16 %v1933
        %v2643 = vunpack.c.l.b16 %v1934
        %v2644 = vunpack.c.h.b16 %v1934
        %v2645 = vunpack.c.l.b16 %v1935
        %v2646 = vunpack.c.h.b16 %v1935
        %v2647 = vunpack.c.l.b16 %v1936
        %v2648 = vunpack.c.h.b16 %v1936
        %v2649 = vunpack.c.l.b16 %v1937
        %v2650 = vunpack.c.h.b16 %v1937
        %v2651 = vunpack.c.l.b16 %v1938
        %v2652 = vunpack.c.h.b16 %v1938
        %v2653 = vunpack.c.l.b16 %v1939
        %v2654 = vunpack.c.h.b16 %v1939
        %v2655 = vunpack.c.l.b16 %v1940
        %v2656 = vunpack.c.h.b16 %v1940
        %v2657 = vunpack.c.l.b16 %v1941
        %v2658 = vunpack.c.h.b16 %v1941
        %v2659 = vunpack.c.l.b16 %v1942
        %v2660 = vunpack.c.h.b16 %v1942
        %v2661 = vunpack.c.l.b16 %v1943
        %v2662 = vunpack.c.h.b16 %v1943
        %v2663 = vunpack.c.l.b16 %v1944
        %v2664 = vunpack.c.h.b16 %v1944
        %v2665 = vunpack.c.l.b16 %v1945
        %v2666 = vunpack.c.h.b16 %v1945
        %v2667 = vunpack.c.l.b16 %v1946
        %v2668 = vunpack.c.h.b16 %v1946
        %v2669 = vpack.c.b16 %v2639, %v2637
        %v2670 = vpack.c.b16 %v2640, %v2638
        %v2671 = vpack.c.b16 %v2643, %v2641
        %v2672 = vpack.c.b16 %v2644, %v2642
        %v2673 = vpack.c.b16 %v2647, %v2645
        %v2674 = vpack.c.b16 %v2648, %v2646
        %v2675 = vpack.c.b16 %v2651, %v2649
        %v2676 = vpack.c.b16 %v2652, %v2650
        %v2677 = vpack.c.b16 %v2655, %v2653
        %v2678 = vpack.c.b16 %v2656, %v2654
        %v2679 = vpack.c.b16 %v2659, %v2657
        %v2680 = vpack.c.b16 %v2660, %v2658
        %v2681 = vpack.c.b16 %v2663, %v2661
        %v2682 = vpack.c.b16 %v2664, %v2662
        %v2683 = vpack.c.b16 %v2667, %v2665
        %v2684 = vpack.c.b16 %v2668, %v2666
        %v2717 = vunpack.c.l.b16 %v2109
        %v2718 = vunpack.c.h.b16 %v2109
        %v2719 = vunpack.c.l.b16 %v2110
        %v2720 = vunpack.c.h.b16 %v2110
        %v2721 = vunpack.c.l.b16 %v2111
        %v2722 = vunpack.c.h.b16 %v2111
        %v2723 = vunpack.c.l.b16 %v2112
        %v2724 = vunpack.c.h.b16 %v2112
        %v2725 = vunpack.c.l.b16 %v2113
        %v2726 = vunpack.c.h.b16 %v2113
        %v2727 = vunpack.c.l.b16 %v2114
        %v2728 = vunpack.c.h.b16 %v2114
        %v2729 = vunpack.c.l.b16 %v2115
        %v2730 = vunpack.c.h.b16 %v2115
        %v2731 = vunpack.c.l.b16 %v2116
        %v2732 = vunpack.c.h.b16 %v2116
        %v2733 = vunpack.c.l.b16 %v2117
        %v2734 = vunpack.c.h.b16 %v2117
        %v2735 = vunpack.c.l.b16 %v2118
        %v2736 = vunpack.c.h.b16 %v2118
        %v2737 = vunpack.c.l.b16 %v2119
        %v2738 = vunpack.c.h.b16 %v2119
        %v2739 = vunpack.c.l.b16 %v2120
        %v2740 = vunpack.c.h.b16 %v2120
        %v2741 = vunpack.c.l.b16 %v2121
        %v2742 = vunpack.c.h.b16 %v2121
        %v2743 = vunpack.c.l.b16 %v2122
        %v2744 = vunpack.c.h.b16 %v2122
        %v2745 = vunpack.c.l.b16 %v2123
        %v2746 = vunpack.c.h.b16 %v2123
        %v2747 = vunpack.c.l.b16 %v2124
        %v2748 = vunpack.c.h.b16 %v2124
        %v2749 = vpack.c.b16 %v2719, %v2717
        %v2750 = vpack.c.b16 %v2720, %v2718
        %v2751 = vpack.c.b16 %v2723, %v2721
        %v2752 = vpack.c.b16 %v2724, %v2722
        %v2753 = vpack.c.b16 %v2727, %v2725
        %v2754 = vpack.c.b16 %v2728, %v2726
        %v2755 = vpack.c.b16 %v2731, %v2729
        %v2756 = vpack.c.b16 %v2732, %v2730
        %v2757 = vpack.c.b16 %v2735, %v2733
        %v2758 = vpack.c.b16 %v2736, %v2734
        %v2759 = vpack.c.b16 %v2739, %v2737
        %v2760 = vpack.c.b16 %v2740, %v2738
        %v2761 = vpack.c.b16 %v2743, %v2741
        %v2762 = vpack.c.b16 %v2744, %v2742
        %v2763 = vpack.c.b16 %v2747, %v2745
        %v2764 = vpack.c.b16 %v2748, %v2746
        %v2781 = vld [vmem:[%s5] sm:$0xff]
        %v2782 = vld [vmem:[%s5 + $0x8] sm:$0xff]
        %v2783 = vld [vmem:[%s5 + $0x10] sm:$0xff]
        %v2784 = vld [vmem:[%s5 + $0x18] sm:$0xff]
        %v2785 = vld [vmem:[%s5 + $0x20] sm:$0xf]
        %v2786 = vld [vmem:[%s6] sm:$0xff]
        %2788 = vset.pattern.permute.xlu0 0
        %2789 = vperm.xlu0 %2788, %v2786
        %v2790 = vpop.permute.xlu0 %2789
        %v2797 = vunpack.c.l.b16 %v2781
        %v2798 = vunpack.c.h.b16 %v2781
        %v2799 = vunpack.c.l.b16 %v2782
        %v2800 = vunpack.c.h.b16 %v2782
        %v2801 = vunpack.c.l.b16 %v2783
        %v2802 = vunpack.c.h.b16 %v2783
        %v2803 = vunpack.c.l.b16 %v2784
        %v2804 = vunpack.c.h.b16 %v2784
        %v2805 = vunpack.c.l.b16 %v2785
        %v2806 = vpack.c.b16 %v2797, %v2797
        %v2807 = vpack.c.b16 %v2798, %v2798
        %v2808 = vpack.c.b16 %v2799, %v2799
        %v2809 = vpack.c.b16 %v2800, %v2800
        %v2810 = vpack.c.b16 %v2801, %v2801
        %v2811 = vpack.c.b16 %v2802, %v2802
        %v2812 = vpack.c.b16 %v2803, %v2803
        %v2813 = vpack.c.b16 %v2804, %v2804
        %v2814 = vpack.c.b16 %v2805, %v2805
        %2824 = vmatpush.bf16.msra.mxu0 %v2187
        %2825 = vmatpush.bf16.msra.mxu0 %v2185
        %2826 = vmatpush.bf16.msra.mxu0 %v2183
        %2827 = vmatpush.bf16.msra.mxu0 %v2181
        %2828 = vmatpush.bf16.msra.mxu0 %v2179
        %2829 = vmatpush.bf16.msra.mxu0 %v2177
        %2830 = vmatpush.bf16.msra.mxu0 %v2175
        %2831 = vmatpush.bf16.msra.mxu0 %v2173
        %2832 = vmatmul.bf16.gmra.mxu0 %v2806
        %v2833 = vpop.f32.mrf.mxu0
        %v2834 = vadd.f32 %v2790, %v2833
        %v2835 = vpop.f32.mrf.mxu0
        %2836 = vdwg.mxu0
        %2837 = vmatpush.bf16.msra.mxu0 %v2267
        %2838 = vmatpush.bf16.msra.mxu0 %v2265
        %2839 = vmatpush.bf16.msra.mxu0 %v2263
        %2840 = vmatpush.bf16.msra.mxu0 %v2261
        %2841 = vmatpush.bf16.msra.mxu0 %v2259
        %2842 = vmatpush.bf16.msra.mxu0 %v2257
        %2843 = vmatpush.bf16.msra.mxu0 %v2255
        %2844 = vmatpush.bf16.msra.mxu0 %v2253
        %2845 = vmatmul.bf16.gmra.mxu0 %v2807
        %v2846 = vpop.f32.mrf.mxu0
        %v2847 = vadd.f32 %v2834, %v2846
        %v2848 = vpop.f32.mrf.mxu0
        %2849 = vdwg.mxu0
        %2850 = vmatpush.bf16.msra.mxu0 %v2347
        %2851 = vmatpush.bf16.msra.mxu0 %v2345
        %2852 = vmatpush.bf16.msra.mxu0 %v2343
        %2853 = vmatpush.bf16.msra.mxu0 %v2341
        %2854 = vmatpush.bf16.msra.mxu0 %v2339
        %2855 = vmatpush.bf16.msra.mxu0 %v2337
        %2856 = vmatpush.bf16.msra.mxu0 %v2335
        %2857 = vmatpush.bf16.msra.mxu0 %v2333
        %2858 = vmatmul.bf16.gmra.mxu0 %v2808
        %v2859 = vpop.f32.mrf.mxu0
        %v2860 = vadd.f32 %v2847, %v2859
        %v2861 = vpop.f32.mrf.mxu0
        %2862 = vdwg.mxu0
        %2863 = vmatpush.bf16.msra.mxu0 %v2427
        %2864 = vmatpush.bf16.msra.mxu0 %v2425
        %2865 = vmatpush.bf16.msra.mxu0 %v2423
        %2866 = vmatpush.bf16.msra.mxu0 %v2421
        %2867 = vmatpush.bf16.msra.mxu0 %v2419
        %2868 = vmatpush.bf16.msra.mxu0 %v2417
        %2869 = vmatpush.bf16.msra.mxu0 %v2415
        %2870 = vmatpush.bf16.msra.mxu0 %v2413
        %2871 = vmatmul.bf16.gmra.mxu0 %v2809
        %v2872 = vpop.f32.mrf.mxu0
        %v2873 = vadd.f32 %v2860, %v2872
        %v2874 = vpop.f32.mrf.mxu0
        %2875 = vdwg.mxu0
        %2876 = vmatpush.bf16.msra.mxu0 %v732
        %2877 = vmatpush.bf16.msra.mxu0 %v731
        %2878 = vmatpush.bf16.msra.mxu0 %v730
        %2879 = vmatpush.bf16.msra.mxu0 %v729
        %2880 = vmatpush.bf16.msra.mxu0 %v728
        %2881 = vmatpush.bf16.msra.mxu0 %v727
        %2882 = vmatpush.bf16.msra.mxu0 %v726
        %2883 = vmatpush.bf16.msra.mxu0 %v725
        %2884 = vmatmul.bf16.gmra.mxu0 %v2810
        %v2885 = vpop.f32.mrf.mxu0
        %v2886 = vadd.f32 %v2873, %v2885
        %v2887 = vpop.f32.mrf.mxu0
        %2888 = vdwg.mxu0
        %2889 = vmatpush.bf16.msra.mxu0 %v2523
        %2890 = vmatpush.bf16.msra.mxu0 %v2521
        %2891 = vmatpush.bf16.msra.mxu0 %v2519
        %2892 = vmatpush.bf16.msra.mxu0 %v2517
        %2893 = vmatpush.bf16.msra.mxu0 %v2515
        %2894 = vmatpush.bf16.msra.mxu0 %v2513
        %2895 = vmatpush.bf16.msra.mxu0 %v2511
        %2896 = vmatpush.bf16.msra.mxu0 %v2509
        %2897 = vmatmul.bf16.gmra.mxu0 %v2811
        %v2898 = vpop.f32.mrf.mxu0
        %v2899 = vadd.f32 %v2886, %v2898
        %v2900 = vpop.f32.mrf.mxu0
        %2901 = vdwg.mxu0
        %2902 = vmatpush.bf16.msra.mxu0 %v2603
        %2903 = vmatpush.bf16.msra.mxu0 %v2601
        %2904 = vmatpush.bf16.msra.mxu0 %v2599
        %2905 = vmatpush.bf16.msra.mxu0 %v2597
        %2906 = vmatpush.bf16.msra.mxu0 %v2595
        %2907 = vmatpush.bf16.msra.mxu0 %v2593
        %2908 = vmatpush.bf16.msra.mxu0 %v2591
        %2909 = vmatpush.bf16.msra.mxu0 %v2589
        %2910 = vmatmul.bf16.gmra.mxu0 %v2812
        %v2911 = vpop.f32.mrf.mxu0
        %v2912 = vadd.f32 %v2899, %v2911
        %v2913 = vpop.f32.mrf.mxu0
        %2914 = vdwg.mxu0
        %2915 = vmatpush.bf16.msra.mxu0 %v2683
        %2916 = vmatpush.bf16.msra.mxu0 %v2681
        %2917 = vmatpush.bf16.msra.mxu0 %v2679
        %2918 = vmatpush.bf16.msra.mxu0 %v2677
        %2919 = vmatpush.bf16.msra.mxu0 %v2675
        %2920 = vmatpush.bf16.msra.mxu0 %v2673
        %2921 = vmatpush.bf16.msra.mxu0 %v2671
        %2922 = vmatpush.bf16.msra.mxu0 %v2669
        %2923 = vmatmul.bf16.gmra.mxu0 %v2813
        %v2924 = vpop.f32.mrf.mxu0
        %v2925 = vadd.f32 %v2912, %v2924
        %v2926 = vpop.f32.mrf.mxu0
        %2927 = vdwg.mxu0
        %2928 = vmatpush.bf16.msra.mxu0 %v2763
        %2929 = vmatpush.bf16.msra.mxu0 %v2761
        %2930 = vmatpush.bf16.msra.mxu0 %v2759
        %2931 = vmatpush.bf16.msra.mxu0 %v2757
        %2932 = vmatpush.bf16.msra.mxu0 %v2755
        %2933 = vmatpush.bf16.msra.mxu0 %v2753
        %2934 = vmatpush.bf16.msra.mxu0 %v2751
        %2935 = vmatpush.bf16.msra.mxu0 %v2749
        %2936 = vmatmul.bf16.gmra.mxu0 %v2814
        %v2937 = vpop.f32.mrf.mxu0
        %v2938 = vadd.f32 %v2925, %v2937
        %v2939 = vpop.f32.mrf.mxu0
        %2940 = vdwg.mxu0
        %2941 = vmatpush.bf16.msra.mxu0 %v2188
        %2942 = vmatpush.bf16.msra.mxu0 %v2186
        %2943 = vmatpush.bf16.msra.mxu0 %v2184
        %2944 = vmatpush.bf16.msra.mxu0 %v2182
        %2945 = vmatpush.bf16.msra.mxu0 %v2180
        %2946 = vmatpush.bf16.msra.mxu0 %v2178
        %2947 = vmatpush.bf16.msra.mxu0 %v2176
        %2948 = vmatpush.bf16.msra.mxu0 %v2174
        %2949 = vmatmul.bf16.gmra.mxu0 %v2806
        %v2950 = vpop.f32.mrf.mxu0
        %v2951 = vadd.f32 %v2790, %v2950
        %v2952 = vpop.f32.mrf.mxu0
        %2953 = vdwg.mxu0
        %2954 = vmatpush.bf16.msra.mxu0 %v2268
        %2955 = vmatpush.bf16.msra.mxu0 %v2266
        %2956 = vmatpush.bf16.msra.mxu0 %v2264
        %2957 = vmatpush.bf16.msra.mxu0 %v2262
        %2958 = vmatpush.bf16.msra.mxu0 %v2260
        %2959 = vmatpush.bf16.msra.mxu0 %v2258
        %2960 = vmatpush.bf16.msra.mxu0 %v2256
        %2961 = vmatpush.bf16.msra.mxu0 %v2254
        %2962 = vmatmul.bf16.gmra.mxu0 %v2807
        %v2963 = vpop.f32.mrf.mxu0
        %v2964 = vadd.f32 %v2951, %v2963
        %v2965 = vpop.f32.mrf.mxu0
        %2966 = vdwg.mxu0
        %2967 = vmatpush.bf16.msra.mxu0 %v2348
        %2968 = vmatpush.bf16.msra.mxu0 %v2346
        %2969 = vmatpush.bf16.msra.mxu0 %v2344
        %2970 = vmatpush.bf16.msra.mxu0 %v2342
        %2971 = vmatpush.bf16.msra.mxu0 %v2340
        %2972 = vmatpush.bf16.msra.mxu0 %v2338
        %2973 = vmatpush.bf16.msra.mxu0 %v2336
        %2974 = vmatpush.bf16.msra.mxu0 %v2334
        %2975 = vmatmul.bf16.gmra.mxu0 %v2808
        %v2976 = vpop.f32.mrf.mxu0
        %v2977 = vadd.f32 %v2964, %v2976
        %v2978 = vpop.f32.mrf.mxu0
        %2979 = vdwg.mxu0
        %2980 = vmatpush.bf16.msra.mxu0 %v2428
        %2981 = vmatpush.bf16.msra.mxu0 %v2426
        %2982 = vmatpush.bf16.msra.mxu0 %v2424
        %2983 = vmatpush.bf16.msra.mxu0 %v2422
        %2984 = vmatpush.bf16.msra.mxu0 %v2420
        %2985 = vmatpush.bf16.msra.mxu0 %v2418
        %2986 = vmatpush.bf16.msra.mxu0 %v2416
        %2987 = vmatpush.bf16.msra.mxu0 %v2414
        %2988 = vmatmul.bf16.gmra.mxu0 %v2809
        %v2989 = vpop.f32.mrf.mxu0
        %v2990 = vadd.f32 %v2977, %v2989
        %v2991 = vpop.f32.mrf.mxu0
        %2992 = vdwg.mxu0
        %2993 = vmatpush.bf16.msra.mxu0 %v692
        %2994 = vmatpush.bf16.msra.mxu0 %v691
        %2995 = vmatpush.bf16.msra.mxu0 %v690
        %2996 = vmatpush.bf16.msra.mxu0 %v689
        %2997 = vmatpush.bf16.msra.mxu0 %v688
        %2998 = vmatpush.bf16.msra.mxu0 %v687
        %2999 = vmatpush.bf16.msra.mxu0 %v686
        %3000 = vmatpush.bf16.msra.mxu0 %v685
        %3001 = vmatmul.bf16.gmra.mxu0 %v2810
        %v3002 = vpop.f32.mrf.mxu0
        %v3003 = vadd.f32 %v2990, %v3002
        %v3004 = vpop.f32.mrf.mxu0
        %3005 = vdwg.mxu0
        %3006 = vmatpush.bf16.msra.mxu0 %v2524
        %3007 = vmatpush.bf16.msra.mxu0 %v2522
        %3008 = vmatpush.bf16.msra.mxu0 %v2520
        %3009 = vmatpush.bf16.msra.mxu0 %v2518
        %3010 = vmatpush.bf16.msra.mxu0 %v2516
        %3011 = vmatpush.bf16.msra.mxu0 %v2514
        %3012 = vmatpush.bf16.msra.mxu0 %v2512
        %3013 = vmatpush.bf16.msra.mxu0 %v2510
        %3014 = vmatmul.bf16.gmra.mxu0 %v2811
        %v3015 = vpop.f32.mrf.mxu0
        %v3016 = vadd.f32 %v3003, %v3015
        %v3017 = vpop.f32.mrf.mxu0
        %3018 = vdwg.mxu0
        %3019 = vmatpush.bf16.msra.mxu0 %v2604
        %3020 = vmatpush.bf16.msra.mxu0 %v2602
        %3021 = vmatpush.bf16.msra.mxu0 %v2600
        %3022 = vmatpush.bf16.msra.mxu0 %v2598
        %3023 = vmatpush.bf16.msra.mxu0 %v2596
        %3024 = vmatpush.bf16.msra.mxu0 %v2594
        %3025 = vmatpush.bf16.msra.mxu0 %v2592
        %3026 = vmatpush.bf16.msra.mxu0 %v2590
        %3027 = vmatmul.bf16.gmra.mxu0 %v2812
        %v3028 = vpop.f32.mrf.mxu0
        %v3029 = vadd.f32 %v3016, %v3028
        %v3030 = vpop.f32.mrf.mxu0
        %3031 = vdwg.mxu0
        %3032 = vmatpush.bf16.msra.mxu0 %v2684
        %3033 = vmatpush.bf16.msra.mxu0 %v2682
        %3034 = vmatpush.bf16.msra.mxu0 %v2680
        %3035 = vmatpush.bf16.msra.mxu0 %v2678
        %3036 = vmatpush.bf16.msra.mxu0 %v2676
        %3037 = vmatpush.bf16.msra.mxu0 %v2674
        %3038 = vmatpush.bf16.msra.mxu0 %v2672
        %3039 = vmatpush.bf16.msra.mxu0 %v2670
        %3040 = vmatmul.bf16.gmra.mxu0 %v2813
        %v3041 = vpop.f32.mrf.mxu0
        %v3042 = vadd.f32 %v3029, %v3041
        %v3043 = vpop.f32.mrf.mxu0
        %3044 = vdwg.mxu0
        %3045 = vmatpush.bf16.msra.mxu0 %v2764
        %3046 = vmatpush.bf16.msra.mxu0 %v2762
        %3047 = vmatpush.bf16.msra.mxu0 %v2760
        %3048 = vmatpush.bf16.msra.mxu0 %v2758
        %3049 = vmatpush.bf16.msra.mxu0 %v2756
        %3050 = vmatpush.bf16.msra.mxu0 %v2754
        %3051 = vmatpush.bf16.msra.mxu0 %v2752
        %3052 = vmatpush.bf16.msra.mxu0 %v2750
        %3053 = vmatmul.bf16.gmra.mxu0 %v2814
        %v3054 = vpop.f32.mrf.mxu0
        %v3055 = vadd.f32 %v3042, %v3054
        %v3056 = vpop.f32.mrf.mxu0
        %3057 = vdwg.mxu0
        %v3058 = vld [vmem:[%s291] sm:$0xff]
        %3060 = vst [vmem:[#allocation1] ss:$2 sm:$0xff] %v3058
        %v3061 = vld.sshfl [vmem:[#allocation1] sm:$0xff pattern:$0x75316420]
        %v3062 = vld.sshfl [vmem:[#allocation1 + $0x8] sm:$0xff pattern:$0x75316420]
        %vm3065 = vcmask 1043456
        %v3066 = vsel %vm3065, %v3061, 0.0
        %v3067 = vrot.slane %v3066, 4
        %v3068 = vadd.f32 %v3066, %v3067
        %v3069 = vrot.slane %v3068, 2
        %v3070 = vadd.f32 %v3068, %v3069
        %v3071 = vrot.slane %v3070, 1
        %v3072 = vadd.f32 %v3070, %v3071
        %v3073 = vsel %vm3065, %v3062, 0.0
        %v3074 = vrot.slane %v3073, 4
        %v3075 = vadd.f32 %v3073, %v3074
        %v3076 = vrot.slane %v3075, 2
        %v3077 = vadd.f32 %v3075, %v3076
        %v3078 = vrot.slane %v3077, 1
        %v3079 = vadd.f32 %v3077, %v3078
        %v3080 = vrcp.pop 4.0
        %v3081 = vmul.f32 4.0, %v3080
        %v3082 = vsub.f32 1.0, %v3081
        %v3083 = vmul.f32 %v3080, %v3082
        %v3084 = vadd.f32 %v3080, %v3083
        %vm3085 = vweird.f32 %v3080
        %v3086 = vsel %vm3085, %v3080, %v3084
        %v3087 = vmul.f32 %v3072, %v3086
        %v3088 = vmul.f32 %v3079, %v3086
        %v3091 = vrot.slane %v3088, 4
        %v3092 = vsel %vm3065, %v3087, %v3091
        %v3094 = vsub.f32 %v3058, %v3092
        %v3095 = vmul.f32 %v3094, %v3094
        %3097 = vst [vmem:[#allocation1] ss:$2 sm:$0xff] %v3095
        %v3098 = vld.sshfl [vmem:[#allocation1] sm:$0xff pattern:$0x75316420]
        %v3099 = vld.sshfl [vmem:[#allocation1 + $0x8] sm:$0xff pattern:$0x75316420]
        %v3102 = vsel %vm3065, %v3098, 0.0
        %v3103 = vrot.slane %v3102, 4
        %v3104 = vadd.f32 %v3102, %v3103
        %v3105 = vrot.slane %v3104, 2
        %v3106 = vadd.f32 %v3104, %v3105
        %v3107 = vrot.slane %v3106, 1
        %v3108 = vadd.f32 %v3106, %v3107
        %v3109 = vsel %vm3065, %v3099, 0.0
        %v3110 = vrot.slane %v3109, 4
        %v3111 = vadd.f32 %v3109, %v3110
        %v3112 = vrot.slane %v3111, 2
        %v3113 = vadd.f32 %v3111, %v3112
        %v3114 = vrot.slane %v3113, 1
        %v3115 = vadd.f32 %v3113, %v3114
        %v3116 = vrcp.pop 3.0
        %v3117 = vmul.f32 3.0, %v3116
        %v3118 = vsub.f32 1.0, %v3117
        %v3119 = vmul.f32 %v3116, %v3118
        %v3120 = vadd.f32 %v3116, %v3119
        %vm3121 = vweird.f32 %v3116
        %v3122 = vsel %vm3121, %v3116, %v3120
        %v3123 = vmul.f32 %v3108, %v3122
        %v3124 = vmul.f32 %v3115, %v3122
        %v3125 = vadd.f32 %v3123, 1e-05
        %v3126 = vadd.f32 %v3124, 1e-05
        %v3127 = vrsqrt.pop %v3125
        %v3128 = vmul.f32 %v3127, %v3125
        %v3129 = vmul.f32 %v3128, %v3127
        %v3130 = vmul.f32 0.5, %v3129
        %v3131 = vsub.f32 1.5, %v3130
        %v3132 = vmul.f32 %v3127, %v3131
        %vm3133 = vweird.f32 %v3125
        %vm3134 = vweird.f32 %v3127
        %vm3135 = vmor %vm3133, %vm3134
        %v3136 = vsel %vm3135, %v3127, %v3132
        %v3137 = vrsqrt.pop %v3126
        %v3138 = vmul.f32 %v3137, %v3126
        %v3139 = vmul.f32 %v3138, %v3137
        %v3140 = vmul.f32 0.5, %v3139
        %v3141 = vsub.f32 1.5, %v3140
        %v3142 = vmul.f32 %v3137, %v3141
        %vm3143 = vweird.f32 %v3126
        %vm3144 = vweird.f32 %v3137
        %vm3145 = vmor %vm3143, %vm3144
        %v3146 = vsel %vm3145, %v3137, %v3142
        %v3149 = vrot.slane %v3146, 4
        %v3150 = vsel %vm3065, %v3136, %v3149
        %v3152 = vmul.f32 %v3094, %v3150
        %v3153 = vadd.f32 %v2938, 1.0
        %v3154 = vadd.f32 %v3055, 1.0
        %v3157 = vrot.slane %v3154, 4
        %v3158 = vsel %vm3065, %v3153, %v3157
        %v3160 = vmul.f32 %v3152, %v3158
        %3163 = vst.sshfl [vmem:[#allocation1] sm:$0xff pattern:$0x75316420] %v2938
        %3164 = vst.sshfl [vmem:[#allocation1 + $0x8] sm:$0xff pattern:$0x75316420] %v3055
        %s3165 = scalar_lea.vmem [#allocation1], 1
        %v3166 = vld [vmem:[%s3165] ss:$2 sm:$0xff]
        %v3168 = vadd.f32 %v3160, %v3166
        %3169 = vst [vmem:[%s286] sm:$0xff] %v3168
        %s3170 = sand.u32 %s186, 1
        %s3171 = scalar_lea.sflag [#allocation3], %s3170
        %s3172 = sand.u32 %s186, 1
        %s3173 = smul.addr %s3172, 8
        %s3174 = scalar_lea.vmem [#allocation2], %s3173
        // Predicated region
        $region49: #{tpu_custom_call.1} parent=47 // pred_check
          %p3175 = pneg %p196
        $region50: #{tpu_custom_call.1} parent=47 // pred_check_branch
          %3177 = sbr.rel (%p3175) target = $region52
        $region51: #{tpu_custom_call.1} parent=47 // pred_region
          %3179 = vsyncadd %s3171, 0
          %s3180 = smul.addr %s21, 2
          %s3181 = smul.addr %s3180, 4
          %s3182 = scalar_lea.hbm %s7, %s3181
          %s3184 = sshll.u32 %s3174, 4
          %s3185 = int_to_ptr.vmem [resolvable:$true] %s3184
          %s3186 = sshll.u32 %s3182, 4
          %s3187 = int_to_ptr.hbm [resolvable:$true] %s3186
          %3189 = dma.vmem_to_hbm [thread:$0]  %s3185, 128, %s3187, %s3171
        $region52: #{tpu_custom_call.1} parent=47 // pred_fallthru
          _
      $region48: #{tpu_custom_call.1} parent=5 // pred_fallthru
        _
      %p3190 = scmp.le.s32.totalorder 2, %s16
      // Predicated region
      $region53: #{tpu_custom_call.1} parent=5 // pred_check
        %p3191 = pneg %p3190
      $region54: #{tpu_custom_call.1} parent=5 // pred_check_branch
        %3193 = sbr.rel (%p3191) target = $region56
      $region55: #{tpu_custom_call.1} parent=5 // pred_region
        %s3194 = ssub.s32 %s16, 2
        // Predicated region
        $region57: #{tpu_custom_call.1} parent=55 // pred_check
          %p3195 = pneg %p202
        $region58: #{tpu_custom_call.1} parent=55 // pred_check_branch
          %3197 = sbr.rel (%p3195) target = $region60
        $region59: #{tpu_custom_call.1} parent=55 // pred_region
          %s3198 = sand.u32 %s187, 1
          %s3199 = scalar_lea.sflag [#allocation3], %s3198
          %s3200 = sand.u32 %s187, 1
          %s3201 = smul.addr %s3200, 8
          %s3202 = scalar_lea.vmem [#allocation2], %s3201
          %3204 = dma.done %s3199, 128
        $region60: #{tpu_custom_call.1} parent=55 // pred_fallthru
          _
      $region56: #{tpu_custom_call.1} parent=5 // pred_fallthru
        _
    $region6: #{tpu_custom_call.1} parent=1 // loop_footer
      %s20 = sadd.s32 1, %s16
    $region7: #{tpu_custom_call.1} parent=1 // loop_footer_branch
      %15 = sbr.rel target = $region3
    $region8: #{tpu_custom_call.1} parent=1 // loop_exit
      _
    %3205 = vsyncpa [#allocation3], 1
    %s3206 = scalar_lea.sflag [#allocation3], 1
    %3207 = vsyncpa %s3206, 1

</llo_original>
